<compile_context>
chip_gen: v7x
topology: tpu7x:2x2x1
jax: 0.10.0
libtpu: 0.0.40
codegen_flags: <defaults>
</compile_context>

<pallas_src>
import math
from functools import partial

import jax
import jax.numpy as jnp
from jax.experimental import pallas as pl
from jax.experimental.pallas import tpu as pltpu  # noqa: F401  (TPU backend)


# ----------------------------- fused Pallas kernel --------------------------

def _fused_attn_kernel(x_ref, wq_ref, bq_ref, wk_ref, bk_ref, wv_ref, bv_ref,
                       wp_ref, bp_ref, o_ref, *, batch, seq, heads, dim_head):
    """Fused self-attention forward.

    x_ref  : (B*N, D)        input activations
    w{q,k,v}_ref : (H, D, Dh) per-head projection weights (scale folded into wq)
    b{q,k,v}_ref : (H, 1, Dh) per-head projection biases  (scale folded into bq)
    wp_ref : (H, Dh, D)      per-head output-projection weights
    bp_ref : (1, D)          output-projection bias
    o_ref  : (B*N, D)        output activations
    """
    x = x_ref[...]                                      # (B*N, D), f32
    acc = jnp.zeros(o_ref.shape, jnp.float32)           # (B*N, D) accumulator

    # Static unroll over heads (H is tiny). Each head does a B-batched
    # attention with the contraction on the last dim -> no in-kernel
    # transposes / relayouts.
    for h in range(heads):
        q = (jnp.dot(x, wq_ref[h], preferred_element_type=jnp.float32)
             + bq_ref[h]).reshape(batch, seq, dim_head)
        k = (jnp.dot(x, wk_ref[h], preferred_element_type=jnp.float32)
             + bk_ref[h]).reshape(batch, seq, dim_head)
        v = (jnp.dot(x, wv_ref[h], preferred_element_type=jnp.float32)
             + bv_ref[h]).reshape(batch, seq, dim_head)

        # scores (B, Nq, Nk); attention scale already baked into wq/bq.
        s = jnp.einsum("bqd,bkd->bqk", q, k, preferred_element_type=jnp.float32)
        m = jnp.max(s, axis=-1, keepdims=True)
        p = jnp.exp(s - m)
        l = jnp.sum(p, axis=-1, keepdims=True)
        p = p * pl.reciprocal(l, approx=True)            # EUP, off the VALU

        o_h = jnp.einsum("bqk,bkd->bqd", p, v,
                         preferred_element_type=jnp.float32)   # (B, N, Dh)

        # Fold the output projection per head: accumulate directly into the
        # lane-dense (B*N, D) output slab (no head concat, no lane slicing).
        acc = acc + jnp.dot(o_h.reshape(batch * seq, dim_head), wp_ref[h],
                            preferred_element_type=jnp.float32)

    o_ref[...] = (acc + bp_ref[...]).astype(o_ref.dtype)
    # TODO(synk): for large sequence lengths, replace the whole-(N,N) score
    # materialization with a flash-style kv-tiled grid (online softmax with
    # m/l/acc scratch) to stay within v7x's 64 MiB VMEM.


# ----------------------------- Attention module ----------------------------

class AttentionPallas:
    def __init__(self, dim, num_heads=None, dim_head=None, qkv_bias=True,
                 scale=None, key=jax.random.PRNGKey(0)):
        if dim_head is None:
            if num_heads is None:
                num_heads = 1
            assert dim % num_heads == 0
            dim_head = dim // num_heads
        else:
            assert dim % dim_head == 0
            num_heads = dim // dim_head
        self.dim = dim
        self.heads = num_heads
        self.dim_head = dim_head
        self.inner_dim = dim_head * num_heads
        self.scale = scale if scale is not None else 1.0 / math.sqrt(dim_head)

        k1, k2, k3, k4 = jax.random.split(key, 4)
        # Weights stored as [in, out] (transposed nn.Linear), deterministic init.
        self.qkv_w = 0.02 * jax.random.normal(k1, (dim, 3 * self.inner_dim), jnp.float32)
        self.qkv_b = (0.01 * jax.random.normal(k2, (3 * self.inner_dim,), jnp.float32)
                      if qkv_bias else jnp.zeros((3 * self.inner_dim,), jnp.float32))
        self.proj_w = 0.02 * jax.random.normal(k3, (self.inner_dim, dim), jnp.float32)
        self.proj_b = 0.01 * jax.random.normal(k4, (dim,), jnp.float32)
        # TODO(synk): qk_norm / rel_pos_emb / KV-cache / attn_mask / dropout paths
        # are not exercised by the default config and are omitted here.

        # ---- kernel-layout parameters (init-time re-layout, constant-folded) ----
        H, Dh, D, inner = self.heads, self.dim_head, dim, self.inner_dim

        def per_head(w_cols, b_cols):
            # columns of qkv_w are ordered (h, d) within each of the q/k/v blocks
            w = jnp.transpose(w_cols.reshape(D, H, Dh), (1, 0, 2))   # (H, D, Dh)
            b = b_cols.reshape(H, 1, Dh)
            return w, b

        wq, bq = per_head(self.qkv_w[:, 0 * inner:1 * inner], self.qkv_b[0 * inner:1 * inner])
        wk, bk = per_head(self.qkv_w[:, 1 * inner:2 * inner], self.qkv_b[1 * inner:2 * inner])
        wv, bv = per_head(self.qkv_w[:, 2 * inner:3 * inner], self.qkv_b[2 * inner:3 * inner])
        # Fold attention scale into the Q projection (free at init time).
        self.wq_k, self.bq_k = wq * self.scale, bq * self.scale
        self.wk_k, self.bk_k = wk, bk
        self.wv_k, self.bv_k = wv, bv
        self.wp_k = self.proj_w.reshape(H, Dh, D)                    # (H, Dh, D)
        self.bp_k = self.proj_b.reshape(1, D)                        # (1, D)

    def __call__(self, x):
        # x: (B, N, D)
        B, N, D = x.shape
        kernel = partial(_fused_attn_kernel, batch=B, seq=N,
                         heads=self.heads, dim_head=self.dim_head)
        out = pl.pallas_call(
            kernel,
            out_shape=jax.ShapeDtypeStruct((B * N, D), jnp.float32),
        )(x.reshape(B * N, D),
          self.wq_k, self.bq_k, self.wk_k, self.bk_k, self.wv_k, self.bv_k,
          self.wp_k, self.bp_k)
        return out.reshape(B, N, D)


# ------------------------------ reference ----------------------------------

def reference_forward(mod: AttentionPallas, x):
    B, N, D = x.shape
    H, Dh = mod.heads, mod.dim_head
    qkv = x.reshape(B * N, D) @ mod.qkv_w + mod.qkv_b
    qkv = qkv.reshape(B, N, 3, H, Dh).transpose(2, 0, 3, 1, 4)
    q, k, v = qkv[0], qkv[1], qkv[2]
    s = jnp.einsum("bhnd,bhmd->bhnm", q, k) * mod.scale
    p = jax.nn.softmax(s, axis=-1)
    o = jnp.einsum("bhnm,bhmd->bhnd", p, v)
    o = o.transpose(0, 2, 1, 3).reshape(B * N, H * Dh)
    return (o @ mod.proj_w + mod.proj_b).reshape(B, N, D)


# ------------------------------ main ----------------------------------------

if __name__ == "__main__":
    key = jax.random.PRNGKey(0)
    kx, kp = jax.random.split(key)

    B, N, D = 2, 8, 32      # batch, sequence, dim
    x = jax.random.normal(kx, (B, N, D), jnp.float32)

    attn = AttentionPallas(dim=D, num_heads=4, qkv_bias=True, key=kp)

    out = attn(x)
    out = jax.block_until_ready(out)

    ref = reference_forward(attn, x)
    assert out.shape == (B, N, D)
    # tolerance accounts for the EUP approximate-reciprocal softmax denominator
    assert jnp.allclose(out, ref, atol=1e-3, rtol=1e-3), "mismatch vs JAX reference"

    print("KERNEL_OK")
</pallas_src>

<mosaic_0001>
module attributes {stable_mosaic.version = 11 : i64} {
  func.func @_fused_attn_kernel(%arg0: memref<16x32xf32, #tpu.memory_space<vmem>>, %arg1: memref<4x32x8xf32, #tpu.memory_space<vmem>>, %arg2: memref<4x1x8xf32, #tpu.memory_space<vmem>>, %arg3: memref<4x32x8xf32, #tpu.memory_space<vmem>>, %arg4: memref<4x1x8xf32, #tpu.memory_space<vmem>>, %arg5: memref<4x32x8xf32, #tpu.memory_space<vmem>>, %arg6: memref<4x1x8xf32, #tpu.memory_space<vmem>>, %arg7: memref<4x8x32xf32, #tpu.memory_space<vmem>>, %arg8: memref<1x32xf32, #tpu.memory_space<vmem>>, %arg9: memref<16x32xf32, #tpu.memory_space<vmem>>) attributes {dimension_semantics = [], scalar_prefetch = 0 : i64, scratch_operands = 0 : i64, tpu.core_type = #tpu.core_type<tc>} {
    %c0 = arith.constant 0 : index
    %c0_0 = arith.constant 0 : index
    %0 = vector.load %arg0[%c0, %c0_0] : memref<16x32xf32, #tpu.memory_space<vmem>>, vector<16x32xf32>
    %cst = arith.constant 0.000000e+00 : f32
    %1 = vector.broadcast %cst : f32 to vector<16x32xf32>
    %c0_1 = arith.constant 0 : index
    %c0_2 = arith.constant 0 : index
    %c0_3 = arith.constant 0 : index
    %2 = vector.load %arg1[%c0_1, %c0_2, %c0_3] : memref<4x32x8xf32, #tpu.memory_space<vmem>>, vector<1x32x8xf32>
    %3 = vector.shape_cast %2 : vector<1x32x8xf32> to vector<32x8xf32>
    %cst_4 = arith.constant dense<0.000000e+00> : vector<16x8xf32>
    %4 = tpu.matmul %0, %3, %cst_4 {dimension_numbers = #tpu.dot_dimension_numbers<[1], [0], [0], [1], [0, 0, 1, 1], [], []>} : vector<16x32xf32>, vector<32x8xf32>, vector<16x8xf32> -> vector<16x8xf32>
    %c0_5 = arith.constant 0 : index
    %c0_6 = arith.constant 0 : index
    %c0_7 = arith.constant 0 : index
    %5 = vector.load %arg2[%c0_5, %c0_6, %c0_7] : memref<4x1x8xf32, #tpu.memory_space<vmem>>, vector<1x1x8xf32>
    %6 = vector.shape_cast %5 : vector<1x1x8xf32> to vector<1x8xf32>
    %7 = vector.broadcast %6 : vector<1x8xf32> to vector<16x8xf32>
    %8 = arith.addf %4, %7 : vector<16x8xf32>
    %9 = vector.shape_cast %8 : vector<16x8xf32> to vector<2x8x8xf32>
    %c0_8 = arith.constant 0 : index
    %c0_9 = arith.constant 0 : index
    %c0_10 = arith.constant 0 : index
    %10 = vector.load %arg3[%c0_8, %c0_9, %c0_10] : memref<4x32x8xf32, #tpu.memory_space<vmem>>, vector<1x32x8xf32>
    %11 = vector.shape_cast %10 : vector<1x32x8xf32> to vector<32x8xf32>
    %cst_11 = arith.constant dense<0.000000e+00> : vector<16x8xf32>
    %12 = tpu.matmul %0, %11, %cst_11 {dimension_numbers = #tpu.dot_dimension_numbers<[1], [0], [0], [1], [0, 0, 1, 1], [], []>} : vector<16x32xf32>, vector<32x8xf32>, vector<16x8xf32> -> vector<16x8xf32>
    %c0_12 = arith.constant 0 : index
    %c0_13 = arith.constant 0 : index
    %c0_14 = arith.constant 0 : index
    %13 = vector.load %arg4[%c0_12, %c0_13, %c0_14] : memref<4x1x8xf32, #tpu.memory_space<vmem>>, vector<1x1x8xf32>
    %14 = vector.shape_cast %13 : vector<1x1x8xf32> to vector<1x8xf32>
    %15 = vector.broadcast %14 : vector<1x8xf32> to vector<16x8xf32>
    %16 = arith.addf %12, %15 : vector<16x8xf32>
    %17 = vector.shape_cast %16 : vector<16x8xf32> to vector<2x8x8xf32>
    %c0_15 = arith.constant 0 : index
    %c0_16 = arith.constant 0 : index
    %c0_17 = arith.constant 0 : index
    %18 = vector.load %arg5[%c0_15, %c0_16, %c0_17] : memref<4x32x8xf32, #tpu.memory_space<vmem>>, vector<1x32x8xf32>
    %19 = vector.shape_cast %18 : vector<1x32x8xf32> to vector<32x8xf32>
    %cst_18 = arith.constant dense<0.000000e+00> : vector<16x8xf32>
    %20 = tpu.matmul %0, %19, %cst_18 {dimension_numbers = #tpu.dot_dimension_numbers<[1], [0], [0], [1], [0, 0, 1, 1], [], []>} : vector<16x32xf32>, vector<32x8xf32>, vector<16x8xf32> -> vector<16x8xf32>
    %c0_19 = arith.constant 0 : index
    %c0_20 = arith.constant 0 : index
    %c0_21 = arith.constant 0 : index
    %21 = vector.load %arg6[%c0_19, %c0_20, %c0_21] : memref<4x1x8xf32, #tpu.memory_space<vmem>>, vector<1x1x8xf32>
    %22 = vector.shape_cast %21 : vector<1x1x8xf32> to vector<1x8xf32>
    %23 = vector.broadcast %22 : vector<1x8xf32> to vector<16x8xf32>
    %24 = arith.addf %20, %23 : vector<16x8xf32>
    %25 = vector.shape_cast %24 : vector<16x8xf32> to vector<2x8x8xf32>
    "tpu.trace_start"() <{level = 10 : i32, message = "bqd,bkd->bqk"}> : () -> ()
    %cst_22 = arith.constant dense<0.000000e+00> : vector<2x8x8xf32>
    %26 = tpu.matmul %9, %17, %cst_22 {dimension_numbers = #tpu.dot_dimension_numbers<[2], [2], [1], [1], [0, 0, 0, 1, 1, 1], [0], [0]>} : vector<2x8x8xf32>, vector<2x8x8xf32>, vector<2x8x8xf32> -> vector<2x8x8xf32>
    "tpu.trace_stop"() : () -> ()
    %cst_23 = arith.constant dense<0xFF800000> : vector<2x8xf32>
    %27 = vector.multi_reduction <maximumf>, %26, %cst_23 [2] : vector<2x8x8xf32> to vector<2x8xf32>
    %28 = vector.shape_cast %27 : vector<2x8xf32> to vector<2x8x1xf32>
    %29 = vector.broadcast %28 : vector<2x8x1xf32> to vector<2x8x8xf32>
    %30 = arith.subf %26, %29 : vector<2x8x8xf32>
    %31 = math.exp %30 : vector<2x8x8xf32>
    %cst_24 = arith.constant dense<0.000000e+00> : vector<2x8xf32>
    %32 = vector.multi_reduction <add>, %31, %cst_24 [2] : vector<2x8x8xf32> to vector<2x8xf32>
    %33 = vector.shape_cast %32 : vector<2x8xf32> to vector<2x8x1xf32>
    %34 = tpu.reciprocal %33 {approx = true} : vector<2x8x1xf32> -> vector<2x8x1xf32>
    %35 = vector.broadcast %34 : vector<2x8x1xf32> to vector<2x8x8xf32>
    %36 = arith.mulf %31, %35 : vector<2x8x8xf32>
    "tpu.trace_start"() <{level = 10 : i32, message = "bqk,bkd->bqd"}> : () -> ()
    %cst_25 = arith.constant dense<0.000000e+00> : vector<2x8x8xf32>
    %37 = tpu.matmul %36, %25, %cst_25 {dimension_numbers = #tpu.dot_dimension_numbers<[2], [1], [1], [2], [0, 0, 0, 1, 1, 2], [0], [0]>} : vector<2x8x8xf32>, vector<2x8x8xf32>, vector<2x8x8xf32> -> vector<2x8x8xf32>
    "tpu.trace_stop"() : () -> ()
    %38 = vector.shape_cast %37 : vector<2x8x8xf32> to vector<16x8xf32>
    %c0_26 = arith.constant 0 : index
    %c0_27 = arith.constant 0 : index
    %c0_28 = arith.constant 0 : index
    %39 = vector.load %arg7[%c0_26, %c0_27, %c0_28] : memref<4x8x32xf32, #tpu.memory_space<vmem>>, vector<1x8x32xf32>
    %40 = vector.shape_cast %39 : vector<1x8x32xf32> to vector<8x32xf32>
    %cst_29 = arith.constant dense<0.000000e+00> : vector<16x32xf32>
    %41 = tpu.matmul %38, %40, %cst_29 {dimension_numbers = #tpu.dot_dimension_numbers<[1], [0], [0], [1], [0, 0, 1, 1], [], []>} : vector<16x8xf32>, vector<8x32xf32>, vector<16x32xf32> -> vector<16x32xf32>
    %42 = arith.addf %1, %41 : vector<16x32xf32>
    %c1 = arith.constant 1 : index
    %c0_30 = arith.constant 0 : index
    %c0_31 = arith.constant 0 : index
    %43 = vector.load %arg1[%c1, %c0_30, %c0_31] : memref<4x32x8xf32, #tpu.memory_space<vmem>>, vector<1x32x8xf32>
    %44 = vector.shape_cast %43 : vector<1x32x8xf32> to vector<32x8xf32>
    %cst_32 = arith.constant dense<0.000000e+00> : vector<16x8xf32>
    %45 = tpu.matmul %0, %44, %cst_32 {dimension_numbers = #tpu.dot_dimension_numbers<[1], [0], [0], [1], [0, 0, 1, 1], [], []>} : vector<16x32xf32>, vector<32x8xf32>, vector<16x8xf32> -> vector<16x8xf32>
    %c1_33 = arith.constant 1 : index
    %c0_34 = arith.constant 0 : index
    %c0_35 = arith.constant 0 : index
    %46 = vector.load %arg2[%c1_33, %c0_34, %c0_35] : memref<4x1x8xf32, #tpu.memory_space<vmem>>, vector<1x1x8xf32>
    %47 = vector.shape_cast %46 : vector<1x1x8xf32> to vector<1x8xf32>
    %48 = vector.broadcast %47 : vector<1x8xf32> to vector<16x8xf32>
    %49 = arith.addf %45, %48 : vector<16x8xf32>
    %50 = vector.shape_cast %49 : vector<16x8xf32> to vector<2x8x8xf32>
    %c1_36 = arith.constant 1 : index
    %c0_37 = arith.constant 0 : index
    %c0_38 = arith.constant 0 : index
    %51 = vector.load %arg3[%c1_36, %c0_37, %c0_38] : memref<4x32x8xf32, #tpu.memory_space<vmem>>, vector<1x32x8xf32>
    %52 = vector.shape_cast %51 : vector<1x32x8xf32> to vector<32x8xf32>
    %cst_39 = arith.constant dense<0.000000e+00> : vector<16x8xf32>
    %53 = tpu.matmul %0, %52, %cst_39 {dimension_numbers = #tpu.dot_dimension_numbers<[1], [0], [0], [1], [0, 0, 1, 1], [], []>} : vector<16x32xf32>, vector<32x8xf32>, vector<16x8xf32> -> vector<16x8xf32>
    %c1_40 = arith.constant 1 : index
    %c0_41 = arith.constant 0 : index
    %c0_42 = arith.constant 0 : index
    %54 = vector.load %arg4[%c1_40, %c0_41, %c0_42] : memref<4x1x8xf32, #tpu.memory_space<vmem>>, vector<1x1x8xf32>
    %55 = vector.shape_cast %54 : vector<1x1x8xf32> to vector<1x8xf32>
    %56 = vector.broadcast %55 : vector<1x8xf32> to vector<16x8xf32>
    %57 = arith.addf %53, %56 : vector<16x8xf32>
    %58 = vector.shape_cast %57 : vector<16x8xf32> to vector<2x8x8xf32>
    %c1_43 = arith.constant 1 : index
    %c0_44 = arith.constant 0 : index
    %c0_45 = arith.constant 0 : index
    %59 = vector.load %arg5[%c1_43, %c0_44, %c0_45] : memref<4x32x8xf32, #tpu.memory_space<vmem>>, vector<1x32x8xf32>
    %60 = vector.shape_cast %59 : vector<1x32x8xf32> to vector<32x8xf32>
    %cst_46 = arith.constant dense<0.000000e+00> : vector<16x8xf32>
    %61 = tpu.matmul %0, %60, %cst_46 {dimension_numbers = #tpu.dot_dimension_numbers<[1], [0], [0], [1], [0, 0, 1, 1], [], []>} : vector<16x32xf32>, vector<32x8xf32>, vector<16x8xf32> -> vector<16x8xf32>
    %c1_47 = arith.constant 1 : index
    %c0_48 = arith.constant 0 : index
    %c0_49 = arith.constant 0 : index
    %62 = vector.load %arg6[%c1_47, %c0_48, %c0_49] : memref<4x1x8xf32, #tpu.memory_space<vmem>>, vector<1x1x8xf32>
    %63 = vector.shape_cast %62 : vector<1x1x8xf32> to vector<1x8xf32>
    %64 = vector.broadcast %63 : vector<1x8xf32> to vector<16x8xf32>
    %65 = arith.addf %61, %64 : vector<16x8xf32>
    %66 = vector.shape_cast %65 : vector<16x8xf32> to vector<2x8x8xf32>
    "tpu.trace_start"() <{level = 10 : i32, message = "bqd,bkd->bqk"}> : () -> ()
    %cst_50 = arith.constant dense<0.000000e+00> : vector<2x8x8xf32>
    %67 = tpu.matmul %50, %58, %cst_50 {dimension_numbers = #tpu.dot_dimension_numbers<[2], [2], [1], [1], [0, 0, 0, 1, 1, 1], [0], [0]>} : vector<2x8x8xf32>, vector<2x8x8xf32>, vector<2x8x8xf32> -> vector<2x8x8xf32>
    "tpu.trace_stop"() : () -> ()
    %cst_51 = arith.constant dense<0xFF800000> : vector<2x8xf32>
    %68 = vector.multi_reduction <maximumf>, %67, %cst_51 [2] : vector<2x8x8xf32> to vector<2x8xf32>
    %69 = vector.shape_cast %68 : vector<2x8xf32> to vector<2x8x1xf32>
    %70 = vector.broadcast %69 : vector<2x8x1xf32> to vector<2x8x8xf32>
    %71 = arith.subf %67, %70 : vector<2x8x8xf32>
    %72 = math.exp %71 : vector<2x8x8xf32>
    %cst_52 = arith.constant dense<0.000000e+00> : vector<2x8xf32>
    %73 = vector.multi_reduction <add>, %72, %cst_52 [2] : vector<2x8x8xf32> to vector<2x8xf32>
    %74 = vector.shape_cast %73 : vector<2x8xf32> to vector<2x8x1xf32>
    %75 = tpu.reciprocal %74 {approx = true} : vector<2x8x1xf32> -> vector<2x8x1xf32>
    %76 = vector.broadcast %75 : vector<2x8x1xf32> to vector<2x8x8xf32>
    %77 = arith.mulf %72, %76 : vector<2x8x8xf32>
    "tpu.trace_start"() <{level = 10 : i32, message = "bqk,bkd->bqd"}> : () -> ()
    %cst_53 = arith.constant dense<0.000000e+00> : vector<2x8x8xf32>
    %78 = tpu.matmul %77, %66, %cst_53 {dimension_numbers = #tpu.dot_dimension_numbers<[2], [1], [1], [2], [0, 0, 0, 1, 1, 2], [0], [0]>} : vector<2x8x8xf32>, vector<2x8x8xf32>, vector<2x8x8xf32> -> vector<2x8x8xf32>
    "tpu.trace_stop"() : () -> ()
    %79 = vector.shape_cast %78 : vector<2x8x8xf32> to vector<16x8xf32>
    %c1_54 = arith.constant 1 : index
    %c0_55 = arith.constant 0 : index
    %c0_56 = arith.constant 0 : index
    %80 = vector.load %arg7[%c1_54, %c0_55, %c0_56] : memref<4x8x32xf32, #tpu.memory_space<vmem>>, vector<1x8x32xf32>
    %81 = vector.shape_cast %80 : vector<1x8x32xf32> to vector<8x32xf32>
    %cst_57 = arith.constant dense<0.000000e+00> : vector<16x32xf32>
    %82 = tpu.matmul %79, %81, %cst_57 {dimension_numbers = #tpu.dot_dimension_numbers<[1], [0], [0], [1], [0, 0, 1, 1], [], []>} : vector<16x8xf32>, vector<8x32xf32>, vector<16x32xf32> -> vector<16x32xf32>
    %83 = arith.addf %42, %82 : vector<16x32xf32>
    %c2 = arith.constant 2 : index
    %c0_58 = arith.constant 0 : index
    %c0_59 = arith.constant 0 : index
    %84 = vector.load %arg1[%c2, %c0_58, %c0_59] : memref<4x32x8xf32, #tpu.memory_space<vmem>>, vector<1x32x8xf32>
    %85 = vector.shape_cast %84 : vector<1x32x8xf32> to vector<32x8xf32>
    %cst_60 = arith.constant dense<0.000000e+00> : vector<16x8xf32>
    %86 = tpu.matmul %0, %85, %cst_60 {dimension_numbers = #tpu.dot_dimension_numbers<[1], [0], [0], [1], [0, 0, 1, 1], [], []>} : vector<16x32xf32>, vector<32x8xf32>, vector<16x8xf32> -> vector<16x8xf32>
    %c2_61 = arith.constant 2 : index
    %c0_62 = arith.constant 0 : index
    %c0_63 = arith.constant 0 : index
    %87 = vector.load %arg2[%c2_61, %c0_62, %c0_63] : memref<4x1x8xf32, #tpu.memory_space<vmem>>, vector<1x1x8xf32>
    %88 = vector.shape_cast %87 : vector<1x1x8xf32> to vector<1x8xf32>
    %89 = vector.broadcast %88 : vector<1x8xf32> to vector<16x8xf32>
    %90 = arith.addf %86, %89 : vector<16x8xf32>
    %91 = vector.shape_cast %90 : vector<16x8xf32> to vector<2x8x8xf32>
    %c2_64 = arith.constant 2 : index
    %c0_65 = arith.constant 0 : index
    %c0_66 = arith.constant 0 : index
    %92 = vector.load %arg3[%c2_64, %c0_65, %c0_66] : memref<4x32x8xf32, #tpu.memory_space<vmem>>, vector<1x32x8xf32>
    %93 = vector.shape_cast %92 : vector<1x32x8xf32> to vector<32x8xf32>
    %cst_67 = arith.constant dense<0.000000e+00> : vector<16x8xf32>
    %94 = tpu.matmul %0, %93, %cst_67 {dimension_numbers = #tpu.dot_dimension_numbers<[1], [0], [0], [1], [0, 0, 1, 1], [], []>} : vector<16x32xf32>, vector<32x8xf32>, vector<16x8xf32> -> vector<16x8xf32>
    %c2_68 = arith.constant 2 : index
    %c0_69 = arith.constant 0 : index
    %c0_70 = arith.constant 0 : index
    %95 = vector.load %arg4[%c2_68, %c0_69, %c0_70] : memref<4x1x8xf32, #tpu.memory_space<vmem>>, vector<1x1x8xf32>
    %96 = vector.shape_cast %95 : vector<1x1x8xf32> to vector<1x8xf32>
    %97 = vector.broadcast %96 : vector<1x8xf32> to vector<16x8xf32>
    %98 = arith.addf %94, %97 : vector<16x8xf32>
    %99 = vector.shape_cast %98 : vector<16x8xf32> to vector<2x8x8xf32>
    %c2_71 = arith.constant 2 : index
    %c0_72 = arith.constant 0 : index
    %c0_73 = arith.constant 0 : index
    %100 = vector.load %arg5[%c2_71, %c0_72, %c0_73] : memref<4x32x8xf32, #tpu.memory_space<vmem>>, vector<1x32x8xf32>
    %101 = vector.shape_cast %100 : vector<1x32x8xf32> to vector<32x8xf32>
    %cst_74 = arith.constant dense<0.000000e+00> : vector<16x8xf32>
    %102 = tpu.matmul %0, %101, %cst_74 {dimension_numbers = #tpu.dot_dimension_numbers<[1], [0], [0], [1], [0, 0, 1, 1], [], []>} : vector<16x32xf32>, vector<32x8xf32>, vector<16x8xf32> -> vector<16x8xf32>
    %c2_75 = arith.constant 2 : index
    %c0_76 = arith.constant 0 : index
    %c0_77 = arith.constant 0 : index
    %103 = vector.load %arg6[%c2_75, %c0_76, %c0_77] : memref<4x1x8xf32, #tpu.memory_space<vmem>>, vector<1x1x8xf32>
    %104 = vector.shape_cast %103 : vector<1x1x8xf32> to vector<1x8xf32>
    %105 = vector.broadcast %104 : vector<1x8xf32> to vector<16x8xf32>
    %106 = arith.addf %102, %105 : vector<16x8xf32>
    %107 = vector.shape_cast %106 : vector<16x8xf32> to vector<2x8x8xf32>
    "tpu.trace_start"() <{level = 10 : i32, message = "bqd,bkd->bqk"}> : () -> ()
    %cst_78 = arith.constant dense<0.000000e+00> : vector<2x8x8xf32>
    %108 = tpu.matmul %91, %99, %cst_78 {dimension_numbers = #tpu.dot_dimension_numbers<[2], [2], [1], [1], [0, 0, 0, 1, 1, 1], [0], [0]>} : vector<2x8x8xf32>, vector<2x8x8xf32>, vector<2x8x8xf32> -> vector<2x8x8xf32>
    "tpu.trace_stop"() : () -> ()
    %cst_79 = arith.constant dense<0xFF800000> : vector<2x8xf32>
    %109 = vector.multi_reduction <maximumf>, %108, %cst_79 [2] : vector<2x8x8xf32> to vector<2x8xf32>
    %110 = vector.shape_cast %109 : vector<2x8xf32> to vector<2x8x1xf32>
    %111 = vector.broadcast %110 : vector<2x8x1xf32> to vector<2x8x8xf32>
    %112 = arith.subf %108, %111 : vector<2x8x8xf32>
    %113 = math.exp %112 : vector<2x8x8xf32>
    %cst_80 = arith.constant dense<0.000000e+00> : vector<2x8xf32>
    %114 = vector.multi_reduction <add>, %113, %cst_80 [2] : vector<2x8x8xf32> to vector<2x8xf32>
    %115 = vector.shape_cast %114 : vector<2x8xf32> to vector<2x8x1xf32>
    %116 = tpu.reciprocal %115 {approx = true} : vector<2x8x1xf32> -> vector<2x8x1xf32>
    %117 = vector.broadcast %116 : vector<2x8x1xf32> to vector<2x8x8xf32>
    %118 = arith.mulf %113, %117 : vector<2x8x8xf32>
    "tpu.trace_start"() <{level = 10 : i32, message = "bqk,bkd->bqd"}> : () -> ()
    %cst_81 = arith.constant dense<0.000000e+00> : vector<2x8x8xf32>
    %119 = tpu.matmul %118, %107, %cst_81 {dimension_numbers = #tpu.dot_dimension_numbers<[2], [1], [1], [2], [0, 0, 0, 1, 1, 2], [0], [0]>} : vector<2x8x8xf32>, vector<2x8x8xf32>, vector<2x8x8xf32> -> vector<2x8x8xf32>
    "tpu.trace_stop"() : () -> ()
    %120 = vector.shape_cast %119 : vector<2x8x8xf32> to vector<16x8xf32>
    %c2_82 = arith.constant 2 : index
    %c0_83 = arith.constant 0 : index
    %c0_84 = arith.constant 0 : index
    %121 = vector.load %arg7[%c2_82, %c0_83, %c0_84] : memref<4x8x32xf32, #tpu.memory_space<vmem>>, vector<1x8x32xf32>
    %122 = vector.shape_cast %121 : vector<1x8x32xf32> to vector<8x32xf32>
    %cst_85 = arith.constant dense<0.000000e+00> : vector<16x32xf32>
    %123 = tpu.matmul %120, %122, %cst_85 {dimension_numbers = #tpu.dot_dimension_numbers<[1], [0], [0], [1], [0, 0, 1, 1], [], []>} : vector<16x8xf32>, vector<8x32xf32>, vector<16x32xf32> -> vector<16x32xf32>
    %124 = arith.addf %83, %123 : vector<16x32xf32>
    %c3 = arith.constant 3 : index
    %c0_86 = arith.constant 0 : index
    %c0_87 = arith.constant 0 : index
    %125 = vector.load %arg1[%c3, %c0_86, %c0_87] : memref<4x32x8xf32, #tpu.memory_space<vmem>>, vector<1x32x8xf32>
    %126 = vector.shape_cast %125 : vector<1x32x8xf32> to vector<32x8xf32>
    %cst_88 = arith.constant dense<0.000000e+00> : vector<16x8xf32>
    %127 = tpu.matmul %0, %126, %cst_88 {dimension_numbers = #tpu.dot_dimension_numbers<[1], [0], [0], [1], [0, 0, 1, 1], [], []>} : vector<16x32xf32>, vector<32x8xf32>, vector<16x8xf32> -> vector<16x8xf32>
    %c3_89 = arith.constant 3 : index
    %c0_90 = arith.constant 0 : index
    %c0_91 = arith.constant 0 : index
    %128 = vector.load %arg2[%c3_89, %c0_90, %c0_91] : memref<4x1x8xf32, #tpu.memory_space<vmem>>, vector<1x1x8xf32>
    %129 = vector.shape_cast %128 : vector<1x1x8xf32> to vector<1x8xf32>
    %130 = vector.broadcast %129 : vector<1x8xf32> to vector<16x8xf32>
    %131 = arith.addf %127, %130 : vector<16x8xf32>
    %132 = vector.shape_cast %131 : vector<16x8xf32> to vector<2x8x8xf32>
    %c3_92 = arith.constant 3 : index
    %c0_93 = arith.constant 0 : index
    %c0_94 = arith.constant 0 : index
    %133 = vector.load %arg3[%c3_92, %c0_93, %c0_94] : memref<4x32x8xf32, #tpu.memory_space<vmem>>, vector<1x32x8xf32>
    %134 = vector.shape_cast %133 : vector<1x32x8xf32> to vector<32x8xf32>
    %cst_95 = arith.constant dense<0.000000e+00> : vector<16x8xf32>
    %135 = tpu.matmul %0, %134, %cst_95 {dimension_numbers = #tpu.dot_dimension_numbers<[1], [0], [0], [1], [0, 0, 1, 1], [], []>} : vector<16x32xf32>, vector<32x8xf32>, vector<16x8xf32> -> vector<16x8xf32>
    %c3_96 = arith.constant 3 : index
    %c0_97 = arith.constant 0 : index
    %c0_98 = arith.constant 0 : index
    %136 = vector.load %arg4[%c3_96, %c0_97, %c0_98] : memref<4x1x8xf32, #tpu.memory_space<vmem>>, vector<1x1x8xf32>
    %137 = vector.shape_cast %136 : vector<1x1x8xf32> to vector<1x8xf32>
    %138 = vector.broadcast %137 : vector<1x8xf32> to vector<16x8xf32>
    %139 = arith.addf %135, %138 : vector<16x8xf32>
    %140 = vector.shape_cast %139 : vector<16x8xf32> to vector<2x8x8xf32>
    %c3_99 = arith.constant 3 : index
    %c0_100 = arith.constant 0 : index
    %c0_101 = arith.constant 0 : index
    %141 = vector.load %arg5[%c3_99, %c0_100, %c0_101] : memref<4x32x8xf32, #tpu.memory_space<vmem>>, vector<1x32x8xf32>
    %142 = vector.shape_cast %141 : vector<1x32x8xf32> to vector<32x8xf32>
    %cst_102 = arith.constant dense<0.000000e+00> : vector<16x8xf32>
    %143 = tpu.matmul %0, %142, %cst_102 {dimension_numbers = #tpu.dot_dimension_numbers<[1], [0], [0], [1], [0, 0, 1, 1], [], []>} : vector<16x32xf32>, vector<32x8xf32>, vector<16x8xf32> -> vector<16x8xf32>
    %c3_103 = arith.constant 3 : index
    %c0_104 = arith.constant 0 : index
    %c0_105 = arith.constant 0 : index
    %144 = vector.load %arg6[%c3_103, %c0_104, %c0_105] : memref<4x1x8xf32, #tpu.memory_space<vmem>>, vector<1x1x8xf32>
    %145 = vector.shape_cast %144 : vector<1x1x8xf32> to vector<1x8xf32>
    %146 = vector.broadcast %145 : vector<1x8xf32> to vector<16x8xf32>
    %147 = arith.addf %143, %146 : vector<16x8xf32>
    %148 = vector.shape_cast %147 : vector<16x8xf32> to vector<2x8x8xf32>
    "tpu.trace_start"() <{level = 10 : i32, message = "bqd,bkd->bqk"}> : () -> ()
    %cst_106 = arith.constant dense<0.000000e+00> : vector<2x8x8xf32>
    %149 = tpu.matmul %132, %140, %cst_106 {dimension_numbers = #tpu.dot_dimension_numbers<[2], [2], [1], [1], [0, 0, 0, 1, 1, 1], [0], [0]>} : vector<2x8x8xf32>, vector<2x8x8xf32>, vector<2x8x8xf32> -> vector<2x8x8xf32>
    "tpu.trace_stop"() : () -> ()
    %cst_107 = arith.constant dense<0xFF800000> : vector<2x8xf32>
    %150 = vector.multi_reduction <maximumf>, %149, %cst_107 [2] : vector<2x8x8xf32> to vector<2x8xf32>
    %151 = vector.shape_cast %150 : vector<2x8xf32> to vector<2x8x1xf32>
    %152 = vector.broadcast %151 : vector<2x8x1xf32> to vector<2x8x8xf32>
    %153 = arith.subf %149, %152 : vector<2x8x8xf32>
    %154 = math.exp %153 : vector<2x8x8xf32>
    %cst_108 = arith.constant dense<0.000000e+00> : vector<2x8xf32>
    %155 = vector.multi_reduction <add>, %154, %cst_108 [2] : vector<2x8x8xf32> to vector<2x8xf32>
    %156 = vector.shape_cast %155 : vector<2x8xf32> to vector<2x8x1xf32>
    %157 = tpu.reciprocal %156 {approx = true} : vector<2x8x1xf32> -> vector<2x8x1xf32>
    %158 = vector.broadcast %157 : vector<2x8x1xf32> to vector<2x8x8xf32>
    %159 = arith.mulf %154, %158 : vector<2x8x8xf32>
    "tpu.trace_start"() <{level = 10 : i32, message = "bqk,bkd->bqd"}> : () -> ()
    %cst_109 = arith.constant dense<0.000000e+00> : vector<2x8x8xf32>
    %160 = tpu.matmul %159, %148, %cst_109 {dimension_numbers = #tpu.dot_dimension_numbers<[2], [1], [1], [2], [0, 0, 0, 1, 1, 2], [0], [0]>} : vector<2x8x8xf32>, vector<2x8x8xf32>, vector<2x8x8xf32> -> vector<2x8x8xf32>
    "tpu.trace_stop"() : () -> ()
    %161 = vector.shape_cast %160 : vector<2x8x8xf32> to vector<16x8xf32>
    %c3_110 = arith.constant 3 : index
    %c0_111 = arith.constant 0 : index
    %c0_112 = arith.constant 0 : index
    %162 = vector.load %arg7[%c3_110, %c0_111, %c0_112] : memref<4x8x32xf32, #tpu.memory_space<vmem>>, vector<1x8x32xf32>
    %163 = vector.shape_cast %162 : vector<1x8x32xf32> to vector<8x32xf32>
    %cst_113 = arith.constant dense<0.000000e+00> : vector<16x32xf32>
    %164 = tpu.matmul %161, %163, %cst_113 {dimension_numbers = #tpu.dot_dimension_numbers<[1], [0], [0], [1], [0, 0, 1, 1], [], []>} : vector<16x8xf32>, vector<8x32xf32>, vector<16x32xf32> -> vector<16x32xf32>
    %165 = arith.addf %124, %164 : vector<16x32xf32>
    %c0_114 = arith.constant 0 : index
    %c0_115 = arith.constant 0 : index
    %166 = vector.load %arg8[%c0_114, %c0_115] : memref<1x32xf32, #tpu.memory_space<vmem>>, vector<1x32xf32>
    %167 = vector.broadcast %166 : vector<1x32xf32> to vector<16x32xf32>
    %168 = arith.addf %165, %167 : vector<16x32xf32>
    %c0_116 = arith.constant 0 : index
    %c0_117 = arith.constant 0 : index
    %169 = vector.load %arg9[%c0_116, %c0_117] : memref<16x32xf32, #tpu.memory_space<vmem>>, vector<16x32xf32>
    tpu.vector_store %arg9[%c0_116, %c0_117], %168 {strides = array<i32>} : memref<16x32xf32, #tpu.memory_space<vmem>>, vector<16x32xf32>,
    return
  }
}

</mosaic_0001>

<llo_original>
// kernel: tpu_custom_call.1
$region0: #{tpu_custom_call.1}
  #allocation0 [shape = 'u32[]', space=smem, size = 0x4, offset = 0x4, fixed_abs, tag = 'smem constant byte address 0x4 - core index']
  #allocation1 [shape = 'u32[144,128]{1,0:T(1,128)}', space=vmem, size = 0x12000, scoped, tag = 'internal scratch']
  %s0 = inlined_call_operand.vmem [shape: f32[16,32], index: 0, kind: input, shape index: {}]
  %s1 = inlined_call_operand.vmem [shape: f32[4,32,8], index: 1, kind: input, shape index: {}]
  %s2 = inlined_call_operand.vmem [shape: f32[4,1,8], index: 2, kind: input, shape index: {}]
  %s3 = inlined_call_operand.vmem [shape: f32[4,32,8], index: 3, kind: input, shape index: {}]
  %s4 = inlined_call_operand.vmem [shape: f32[4,1,8], index: 4, kind: input, shape index: {}]
  %s5 = inlined_call_operand.vmem [shape: f32[4,32,8], index: 5, kind: input, shape index: {}]
  %s6 = inlined_call_operand.vmem [shape: f32[4,1,8], index: 6, kind: input, shape index: {}]
  %s7 = inlined_call_operand.vmem [shape: f32[4,8,32], index: 7, kind: input, shape index: {}]
  %s8 = inlined_call_operand.vmem [shape: f32[1,32], index: 8, kind: input, shape index: {}]
  %s9 = inlined_call_operand.hbm [shape: f32[16,32], index: 9, kind: output, shape index: {}]
  %s10 = sld [smem:[#allocation0]]
  $region46: #{tpu_custom_call.1} parent=0
    _
  %s12 = ssub.s32 1, %s10
  %s13 = scalar_select 0, %s12, %s10
  $region1: #{tpu_custom_call.1} parent=0
    #allocation2 [shape = 'u8[8192]{0}', space=vmem, size = 0x2000, scoped, tag = 'output window, operand 0, single buffered']
    #allocation3 [shape = 's32[1]{0}', space=sflag, size = 0x4, scoped, tag = 'scoped memory for tpu_custom_call.1']
    %14 = vsyncpa [#allocation3], 0
    // Predicated region
    $region2: #{tpu_custom_call.1} parent=1 // pred_check
      _
    $region3: #{tpu_custom_call.1} parent=1 // pred_check_branch
      %16 = sbr.rel (0) target = $region5
    $region4: #{tpu_custom_call.1} parent=1 // pred_region
      _
    $region5: #{tpu_custom_call.1} parent=1 // pred_fallthru
      _
    // Predicated region
    $region6: #{tpu_custom_call.1} parent=1 // pred_check
      _
    $region7: #{tpu_custom_call.1} parent=1 // pred_check_branch
      %18 = sbr.rel (0) target = $region9
    $region8: #{tpu_custom_call.1} parent=1 // pred_region
      _
    $region9: #{tpu_custom_call.1} parent=1 // pred_fallthru
      _
    // Predicated region
    $region10: #{tpu_custom_call.1} parent=1 // pred_check
      _
    $region11: #{tpu_custom_call.1} parent=1 // pred_check_branch
      %20 = sbr.rel (0) target = $region13
    $region12: #{tpu_custom_call.1} parent=1 // pred_region
      _
    $region13: #{tpu_custom_call.1} parent=1 // pred_fallthru
      _
    // Predicated region
    $region14: #{tpu_custom_call.1} parent=1 // pred_check
      _
    $region15: #{tpu_custom_call.1} parent=1 // pred_check_branch
      %22 = sbr.rel (0) target = $region17
    $region16: #{tpu_custom_call.1} parent=1 // pred_region
      _
    $region17: #{tpu_custom_call.1} parent=1 // pred_fallthru
      _
    // Predicated region
    $region18: #{tpu_custom_call.1} parent=1 // pred_check
      _
    $region19: #{tpu_custom_call.1} parent=1 // pred_check_branch
      %24 = sbr.rel (0) target = $region21
    $region20: #{tpu_custom_call.1} parent=1 // pred_region
      _
    $region21: #{tpu_custom_call.1} parent=1 // pred_fallthru
      _
    // Predicated region
    $region22: #{tpu_custom_call.1} parent=1 // pred_check
      _
    $region23: #{tpu_custom_call.1} parent=1 // pred_check_branch
      %26 = sbr.rel (0) target = $region25
    $region24: #{tpu_custom_call.1} parent=1 // pred_region
      _
    $region25: #{tpu_custom_call.1} parent=1 // pred_fallthru
      _
    // Predicated region
    $region26: #{tpu_custom_call.1} parent=1 // pred_check
      _
    $region27: #{tpu_custom_call.1} parent=1 // pred_check_branch
      %28 = sbr.rel (0) target = $region29
    $region28: #{tpu_custom_call.1} parent=1 // pred_region
      _
    $region29: #{tpu_custom_call.1} parent=1 // pred_fallthru
      _
    // Predicated region
    $region30: #{tpu_custom_call.1} parent=1 // pred_check
      _
    $region31: #{tpu_custom_call.1} parent=1 // pred_check_branch
      %30 = sbr.rel (0) target = $region33
    $region32: #{tpu_custom_call.1} parent=1 // pred_region
      _
    $region33: #{tpu_custom_call.1} parent=1 // pred_fallthru
      _
    // Predicated region
    $region34: #{tpu_custom_call.1} parent=1 // pred_check
      _
    $region35: #{tpu_custom_call.1} parent=1 // pred_check_branch
      %32 = sbr.rel (0) target = $region37
    $region36: #{tpu_custom_call.1} parent=1 // pred_region
      _
    $region37: #{tpu_custom_call.1} parent=1 // pred_fallthru
      _
    %v33 = vld [vmem:[%s0] sm:$0xff]
    %v34 = vld [vmem:[%s0 + $0x8] sm:$0xff]
    %v35 = vld [vmem:[%s1] sm:$0xff]
    %v36 = vld [vmem:[%s1 + $0x8] sm:$0xff]
    %v37 = vld [vmem:[%s1 + $0x10] sm:$0xff]
    %v38 = vld [vmem:[%s1 + $0x18] sm:$0xff]
    %v39 = vld [vmem:[%s2] sm:$0x1]
    %v41 = vlaneseq
    %v42 = vshrl.u32 %v41, 7
    %v43 = vsub.s32 0, %v42
    %v44 = vrot.slane %v39, %v43
    %vm46 = vcmask 261120
    %v48 = vsel %vm46, %v33, 0
    %v51 = vsel %vm46, %v34, 0
    %53 = vmatprep.subr.mxu0 0.0
    %54 = vmatpush1.msra.mxu0 %v35
    %55 = vmatprep.subr.mxu0 0.0
    %56 = vmatpush1.msra.mxu0 %v36
    %57 = vmatprep.subr.mxu0 0.0
    %58 = vmatpush1.msra.mxu0 %v37
    %59 = vmatprep.subr.mxu0 0.0
    %60 = vmatpush1.msra.mxu0 %v38
    %61 = vmatprep.subr.mxu0 0.0
    %62 = vmatpush1.msra.mxu0 0.0
    %63 = vmatprep.subr.mxu0 0.0
    %64 = vmatpush1.msra.mxu0 0.0
    %65 = vmatprep.subr.mxu0 0.0
    %66 = vmatpush1.msra.mxu0 0.0
    %67 = vmatprep.subr.mxu0 0.0
    %68 = vmatpush1.msra.mxu0 0.0
    %69 = vmatprep.subr.mxu0 0.0
    %70 = vmatpush1.msra.mxu0 0.0
    %71 = vmatprep.subr.mxu0 0.0
    %72 = vmatpush1.msra.mxu0 0.0
    %73 = vmatprep.subr.mxu0 0.0
    %74 = vmatpush1.msra.mxu0 0.0
    %75 = vmatprep.subr.mxu0 0.0
    %76 = vmatpush1.msra.mxu0 0.0
    %77 = vmatprep.subr.mxu0 0.0
    %78 = vmatpush1.msra.mxu0 0.0
    %79 = vmatprep.subr.mxu0 0.0
    %80 = vmatpush1.msra.mxu0 0.0
    %81 = vmatprep.subr.mxu0 0.0
    %82 = vmatpush1.msra.mxu0 0.0
    %83 = vmatprep.subr.mxu0 0.0
    %84 = vmatpush1.msra.mxu0 0.0
    %85 = vmatprep.subr.mxu0 0.0
    %86 = vmatpush1.msra.mxu0 0.0
    %87 = vmatprep.subr.mxu0 0.0
    %88 = vmatpush1.msra.mxu0 0.0
    %89 = vmatprep.subr.mxu0 0.0
    %90 = vmatpush1.msra.mxu0 0.0
    %91 = vmatprep.subr.mxu0 0.0
    %92 = vmatpush1.msra.mxu0 0.0
    %93 = vmatprep.subr.mxu0 0.0
    %94 = vmatpush1.msra.mxu0 0.0
    %95 = vmatprep.subr.mxu0 0.0
    %96 = vmatpush1.msra.mxu0 0.0
    %97 = vmatprep.subr.mxu0 0.0
    %98 = vmatpush1.msra.mxu0 0.0
    %99 = vmatprep.subr.mxu0 0.0
    %100 = vmatpush1.msra.mxu0 0.0
    %101 = vmatprep.subr.mxu0 0.0
    %102 = vmatpush1.msra.mxu0 0.0
    %103 = vmatprep.subr.mxu0 0.0
    %104 = vmatpush1.msra.mxu0 0.0
    %105 = vmatprep.subr.mxu0 0.0
    %106 = vmatpush1.msra.mxu0 0.0
    %107 = vmatprep.subr.mxu0 0.0
    %108 = vmatpush1.msra.mxu0 0.0
    %109 = vmatprep.subr.mxu0 0.0
    %110 = vmatpush1.msra.mxu0 0.0
    %111 = vmatprep.subr.mxu0 0.0
    %112 = vmatpush1.msra.mxu0 0.0
    %113 = vmatprep.subr.mxu0 0.0
    %114 = vmatpush1.msra.mxu0 0.0
    %115 = vmatprep.subr.mxu0 0.0
    %116 = vmatpush1.msra.mxu0 0.0
    %117 = vmatprep.mubr.f32.mxu0 0.0
    %118 = vmatmul.mubr.f32.gmra.mrb[0].mxu0 %v48
    %v119 = vpop.f32.mrb[0].mxu0
    %v120 = vadd.f32 %v44, %v119
    %v121 = vpop.f32.mrb[0].mxu0
    %122 = vmatprep.mubr.f32.mxu0 0.0
    %123 = vmatmul.mubr.f32.gmra.mrb[0].mxu0 %v51
    %v124 = vpop.f32.mrb[0].mxu0
    %v125 = vadd.f32 %v44, %v124
    %v126 = vpop.f32.mrb[0].mxu0
    %127 = vdwg.mxu0
    %v128 = vld [vmem:[%s3] sm:$0xff]
    %v129 = vld [vmem:[%s3 + $0x8] sm:$0xff]
    %v130 = vld [vmem:[%s3 + $0x10] sm:$0xff]
    %v131 = vld [vmem:[%s3 + $0x18] sm:$0xff]
    %v132 = vld [vmem:[%s4] sm:$0x1]
    %v134 = vlaneseq
    %v135 = vshrl.u32 %v134, 7
    %v136 = vsub.s32 0, %v135
    %v137 = vrot.slane %v132, %v136
    %139 = vmatprep.subr.mxu0 0.0
    %140 = vmatpush1.msra.mxu0 %v128
    %141 = vmatprep.subr.mxu0 0.0
    %142 = vmatpush1.msra.mxu0 %v129
    %143 = vmatprep.subr.mxu0 0.0
    %144 = vmatpush1.msra.mxu0 %v130
    %145 = vmatprep.subr.mxu0 0.0
    %146 = vmatpush1.msra.mxu0 %v131
    %147 = vmatprep.subr.mxu0 0.0
    %148 = vmatpush1.msra.mxu0 0.0
    %149 = vmatprep.subr.mxu0 0.0
    %150 = vmatpush1.msra.mxu0 0.0
    %151 = vmatprep.subr.mxu0 0.0
    %152 = vmatpush1.msra.mxu0 0.0
    %153 = vmatprep.subr.mxu0 0.0
    %154 = vmatpush1.msra.mxu0 0.0
    %155 = vmatprep.subr.mxu0 0.0
    %156 = vmatpush1.msra.mxu0 0.0
    %157 = vmatprep.subr.mxu0 0.0
    %158 = vmatpush1.msra.mxu0 0.0
    %159 = vmatprep.subr.mxu0 0.0
    %160 = vmatpush1.msra.mxu0 0.0
    %161 = vmatprep.subr.mxu0 0.0
    %162 = vmatpush1.msra.mxu0 0.0
    %163 = vmatprep.subr.mxu0 0.0
    %164 = vmatpush1.msra.mxu0 0.0
    %165 = vmatprep.subr.mxu0 0.0
    %166 = vmatpush1.msra.mxu0 0.0
    %167 = vmatprep.subr.mxu0 0.0
    %168 = vmatpush1.msra.mxu0 0.0
    %169 = vmatprep.subr.mxu0 0.0
    %170 = vmatpush1.msra.mxu0 0.0
    %171 = vmatprep.subr.mxu0 0.0
    %172 = vmatpush1.msra.mxu0 0.0
    %173 = vmatprep.subr.mxu0 0.0
    %174 = vmatpush1.msra.mxu0 0.0
    %175 = vmatprep.subr.mxu0 0.0
    %176 = vmatpush1.msra.mxu0 0.0
    %177 = vmatprep.subr.mxu0 0.0
    %178 = vmatpush1.msra.mxu0 0.0
    %179 = vmatprep.subr.mxu0 0.0
    %180 = vmatpush1.msra.mxu0 0.0
    %181 = vmatprep.subr.mxu0 0.0
    %182 = vmatpush1.msra.mxu0 0.0
    %183 = vmatprep.subr.mxu0 0.0
    %184 = vmatpush1.msra.mxu0 0.0
    %185 = vmatprep.subr.mxu0 0.0
    %186 = vmatpush1.msra.mxu0 0.0
    %187 = vmatprep.subr.mxu0 0.0
    %188 = vmatpush1.msra.mxu0 0.0
    %189 = vmatprep.subr.mxu0 0.0
    %190 = vmatpush1.msra.mxu0 0.0
    %191 = vmatprep.subr.mxu0 0.0
    %192 = vmatpush1.msra.mxu0 0.0
    %193 = vmatprep.subr.mxu0 0.0
    %194 = vmatpush1.msra.mxu0 0.0
    %195 = vmatprep.subr.mxu0 0.0
    %196 = vmatpush1.msra.mxu0 0.0
    %197 = vmatprep.subr.mxu0 0.0
    %198 = vmatpush1.msra.mxu0 0.0
    %199 = vmatprep.subr.mxu0 0.0
    %200 = vmatpush1.msra.mxu0 0.0
    %201 = vmatprep.subr.mxu0 0.0
    %202 = vmatpush1.msra.mxu0 0.0
    %203 = vmatprep.mubr.f32.mxu0 0.0
    %204 = vmatmul.mubr.f32.gmra.mrb[0].mxu0 %v48
    %v205 = vpop.f32.mrb[0].mxu0
    %v206 = vadd.f32 %v137, %v205
    %v207 = vpop.f32.mrb[0].mxu0
    %208 = vmatprep.mubr.f32.mxu0 0.0
    %209 = vmatmul.mubr.f32.gmra.mrb[0].mxu0 %v51
    %v210 = vpop.f32.mrb[0].mxu0
    %v211 = vadd.f32 %v137, %v210
    %v212 = vpop.f32.mrb[0].mxu0
    %213 = vdwg.mxu0
    %v214 = vld [vmem:[%s5] sm:$0xff]
    %v215 = vld [vmem:[%s5 + $0x8] sm:$0xff]
    %v216 = vld [vmem:[%s5 + $0x10] sm:$0xff]
    %v217 = vld [vmem:[%s5 + $0x18] sm:$0xff]
    %v218 = vld [vmem:[%s6] sm:$0x1]
    %v220 = vlaneseq
    %v221 = vshrl.u32 %v220, 7
    %v222 = vsub.s32 0, %v221
    %v223 = vrot.slane %v218, %v222
    %225 = vmatprep.subr.mxu0 0.0
    %226 = vmatpush1.msra.mxu0 %v214
    %227 = vmatprep.subr.mxu0 0.0
    %228 = vmatpush1.msra.mxu0 %v215
    %229 = vmatprep.subr.mxu0 0.0
    %230 = vmatpush1.msra.mxu0 %v216
    %231 = vmatprep.subr.mxu0 0.0
    %232 = vmatpush1.msra.mxu0 %v217
    %233 = vmatprep.subr.mxu0 0.0
    %234 = vmatpush1.msra.mxu0 0.0
    %235 = vmatprep.subr.mxu0 0.0
    %236 = vmatpush1.msra.mxu0 0.0
    %237 = vmatprep.subr.mxu0 0.0
    %238 = vmatpush1.msra.mxu0 0.0
    %239 = vmatprep.subr.mxu0 0.0
    %240 = vmatpush1.msra.mxu0 0.0
    %241 = vmatprep.subr.mxu0 0.0
    %242 = vmatpush1.msra.mxu0 0.0
    %243 = vmatprep.subr.mxu0 0.0
    %244 = vmatpush1.msra.mxu0 0.0
    %245 = vmatprep.subr.mxu0 0.0
    %246 = vmatpush1.msra.mxu0 0.0
    %247 = vmatprep.subr.mxu0 0.0
    %248 = vmatpush1.msra.mxu0 0.0
    %249 = vmatprep.subr.mxu0 0.0
    %250 = vmatpush1.msra.mxu0 0.0
    %251 = vmatprep.subr.mxu0 0.0
    %252 = vmatpush1.msra.mxu0 0.0
    %253 = vmatprep.subr.mxu0 0.0
    %254 = vmatpush1.msra.mxu0 0.0
    %255 = vmatprep.subr.mxu0 0.0
    %256 = vmatpush1.msra.mxu0 0.0
    %257 = vmatprep.subr.mxu0 0.0
    %258 = vmatpush1.msra.mxu0 0.0
    %259 = vmatprep.subr.mxu0 0.0
    %260 = vmatpush1.msra.mxu0 0.0
    %261 = vmatprep.subr.mxu0 0.0
    %262 = vmatpush1.msra.mxu0 0.0
    %263 = vmatprep.subr.mxu0 0.0
    %264 = vmatpush1.msra.mxu0 0.0
    %265 = vmatprep.subr.mxu0 0.0
    %266 = vmatpush1.msra.mxu0 0.0
    %267 = vmatprep.subr.mxu0 0.0
    %268 = vmatpush1.msra.mxu0 0.0
    %269 = vmatprep.subr.mxu0 0.0
    %270 = vmatpush1.msra.mxu0 0.0
    %271 = vmatprep.subr.mxu0 0.0
    %272 = vmatpush1.msra.mxu0 0.0
    %273 = vmatprep.subr.mxu0 0.0
    %274 = vmatpush1.msra.mxu0 0.0
    %275 = vmatprep.subr.mxu0 0.0
    %276 = vmatpush1.msra.mxu0 0.0
    %277 = vmatprep.subr.mxu0 0.0
    %278 = vmatpush1.msra.mxu0 0.0
    %279 = vmatprep.subr.mxu0 0.0
    %280 = vmatpush1.msra.mxu0 0.0
    %281 = vmatprep.subr.mxu0 0.0
    %282 = vmatpush1.msra.mxu0 0.0
    %283 = vmatprep.subr.mxu0 0.0
    %284 = vmatpush1.msra.mxu0 0.0
    %285 = vmatprep.subr.mxu0 0.0
    %286 = vmatpush1.msra.mxu0 0.0
    %287 = vmatprep.subr.mxu0 0.0
    %288 = vmatpush1.msra.mxu0 0.0
    %289 = vmatprep.mubr.f32.mxu0 0.0
    %290 = vmatmul.mubr.f32.gmra.mrb[0].mxu0 %v48
    %v291 = vpop.f32.mrb[0].mxu0
    %v292 = vadd.f32 %v223, %v291
    %v293 = vpop.f32.mrb[0].mxu0
    %294 = vmatprep.mubr.f32.mxu0 0.0
    %295 = vmatmul.mubr.f32.gmra.mrb[0].mxu0 %v51
    %v296 = vpop.f32.mrb[0].mxu0
    %v297 = vadd.f32 %v223, %v296
    %v298 = vpop.f32.mrb[0].mxu0
    %299 = vdwg.mxu0
    %vm300 = vcmask 64512
    %v302 = vsel %vm300, %v120, 0
    %v305 = vsel %vm300, %v206, 0
    %307 = vmatprep.subr.mxu0 0.0
    %308 = vmatpush1.xpose.msra.mxu0 %v305
    %309 = vmatprep.subr.mxu0 0.0
    %310 = vmatpush1.xpose.msra.mxu0 0.0
    %311 = vmatprep.subr.mxu0 0.0
    %312 = vmatpush1.xpose.msra.mxu0 0.0
    %313 = vmatprep.subr.mxu0 0.0
    %314 = vmatpush1.xpose.msra.mxu0 0.0
    %315 = vmatprep.subr.mxu0 0.0
    %316 = vmatpush1.xpose.msra.mxu0 0.0
    %317 = vmatprep.subr.mxu0 0.0
    %318 = vmatpush1.xpose.msra.mxu0 0.0
    %319 = vmatprep.subr.mxu0 0.0
    %320 = vmatpush1.xpose.msra.mxu0 0.0
    %321 = vmatprep.subr.mxu0 0.0
    %322 = vmatpush1.xpose.msra.mxu0 0.0
    %323 = vmatprep.subr.mxu0 0.0
    %324 = vmatpush1.xpose.msra.mxu0 0.0
    %325 = vmatprep.subr.mxu0 0.0
    %326 = vmatpush1.xpose.msra.mxu0 0.0
    %327 = vmatprep.subr.mxu0 0.0
    %328 = vmatpush1.xpose.msra.mxu0 0.0
    %329 = vmatprep.subr.mxu0 0.0
    %330 = vmatpush1.xpose.msra.mxu0 0.0
    %331 = vmatprep.subr.mxu0 0.0
    %332 = vmatpush1.xpose.msra.mxu0 0.0
    %333 = vmatprep.subr.mxu0 0.0
    %334 = vmatpush1.xpose.msra.mxu0 0.0
    %335 = vmatprep.subr.mxu0 0.0
    %336 = vmatpush1.xpose.msra.mxu0 0.0
    %337 = vmatprep.subr.mxu0 0.0
    %338 = vmatpush1.xpose.msra.mxu0 0.0
    %339 = vmatprep.subr.mxu0 0.0
    %340 = vmatpush1.xpose.msra.mxu0 0.0
    %341 = vmatprep.subr.mxu0 0.0
    %342 = vmatpush1.xpose.msra.mxu0 0.0
    %343 = vmatprep.subr.mxu0 0.0
    %344 = vmatpush1.xpose.msra.mxu0 0.0
    %345 = vmatprep.subr.mxu0 0.0
    %346 = vmatpush1.xpose.msra.mxu0 0.0
    %347 = vmatprep.subr.mxu0 0.0
    %348 = vmatpush1.xpose.msra.mxu0 0.0
    %349 = vmatprep.subr.mxu0 0.0
    %350 = vmatpush1.xpose.msra.mxu0 0.0
    %351 = vmatprep.subr.mxu0 0.0
    %352 = vmatpush1.xpose.msra.mxu0 0.0
    %353 = vmatprep.subr.mxu0 0.0
    %354 = vmatpush1.xpose.msra.mxu0 0.0
    %355 = vmatprep.subr.mxu0 0.0
    %356 = vmatpush1.xpose.msra.mxu0 0.0
    %357 = vmatprep.subr.mxu0 0.0
    %358 = vmatpush1.xpose.msra.mxu0 0.0
    %359 = vmatprep.subr.mxu0 0.0
    %360 = vmatpush1.xpose.msra.mxu0 0.0
    %361 = vmatprep.subr.mxu0 0.0
    %362 = vmatpush1.xpose.msra.mxu0 0.0
    %363 = vmatprep.subr.mxu0 0.0
    %364 = vmatpush1.xpose.msra.mxu0 0.0
    %365 = vmatprep.subr.mxu0 0.0
    %366 = vmatpush1.xpose.msra.mxu0 0.0
    %367 = vmatprep.subr.mxu0 0.0
    %368 = vmatpush1.xpose.msra.mxu0 0.0
    %369 = vmatprep.subr.mxu0 0.0
    %370 = vmatpush1.xpose.msra.mxu0 0.0
    %371 = vmatprep.mubr.f32.mxu0 0.0
    %372 = vmatmul.mubr.f32.gmra.mrb[0].mxu0 %v302
    %v373 = vpop.f32.mrb[0].mxu0
    %v374 = vadd.f32 0.0, %v373
    %v375 = vpop.f32.mrb[0].mxu0
    %376 = vdwg.mxu0
    %v378 = vsel %vm300, %v125, 0
    %v381 = vsel %vm300, %v211, 0
    %383 = vmatprep.subr.mxu0 0.0
    %384 = vmatpush1.xpose.msra.mxu0 %v381
    %385 = vmatprep.subr.mxu0 0.0
    %386 = vmatpush1.xpose.msra.mxu0 0.0
    %387 = vmatprep.subr.mxu0 0.0
    %388 = vmatpush1.xpose.msra.mxu0 0.0
    %389 = vmatprep.subr.mxu0 0.0
    %390 = vmatpush1.xpose.msra.mxu0 0.0
    %391 = vmatprep.subr.mxu0 0.0
    %392 = vmatpush1.xpose.msra.mxu0 0.0
    %393 = vmatprep.subr.mxu0 0.0
    %394 = vmatpush1.xpose.msra.mxu0 0.0
    %395 = vmatprep.subr.mxu0 0.0
    %396 = vmatpush1.xpose.msra.mxu0 0.0
    %397 = vmatprep.subr.mxu0 0.0
    %398 = vmatpush1.xpose.msra.mxu0 0.0
    %399 = vmatprep.subr.mxu0 0.0
    %400 = vmatpush1.xpose.msra.mxu0 0.0
    %401 = vmatprep.subr.mxu0 0.0
    %402 = vmatpush1.xpose.msra.mxu0 0.0
    %403 = vmatprep.subr.mxu0 0.0
    %404 = vmatpush1.xpose.msra.mxu0 0.0
    %405 = vmatprep.subr.mxu0 0.0
    %406 = vmatpush1.xpose.msra.mxu0 0.0
    %407 = vmatprep.subr.mxu0 0.0
    %408 = vmatpush1.xpose.msra.mxu0 0.0
    %409 = vmatprep.subr.mxu0 0.0
    %410 = vmatpush1.xpose.msra.mxu0 0.0
    %411 = vmatprep.subr.mxu0 0.0
    %412 = vmatpush1.xpose.msra.mxu0 0.0
    %413 = vmatprep.subr.mxu0 0.0
    %414 = vmatpush1.xpose.msra.mxu0 0.0
    %415 = vmatprep.subr.mxu0 0.0
    %416 = vmatpush1.xpose.msra.mxu0 0.0
    %417 = vmatprep.subr.mxu0 0.0
    %418 = vmatpush1.xpose.msra.mxu0 0.0
    %419 = vmatprep.subr.mxu0 0.0
    %420 = vmatpush1.xpose.msra.mxu0 0.0
    %421 = vmatprep.subr.mxu0 0.0
    %422 = vmatpush1.xpose.msra.mxu0 0.0
    %423 = vmatprep.subr.mxu0 0.0
    %424 = vmatpush1.xpose.msra.mxu0 0.0
    %425 = vmatprep.subr.mxu0 0.0
    %426 = vmatpush1.xpose.msra.mxu0 0.0
    %427 = vmatprep.subr.mxu0 0.0
    %428 = vmatpush1.xpose.msra.mxu0 0.0
    %429 = vmatprep.subr.mxu0 0.0
    %430 = vmatpush1.xpose.msra.mxu0 0.0
    %431 = vmatprep.subr.mxu0 0.0
    %432 = vmatpush1.xpose.msra.mxu0 0.0
    %433 = vmatprep.subr.mxu0 0.0
    %434 = vmatpush1.xpose.msra.mxu0 0.0
    %435 = vmatprep.subr.mxu0 0.0
    %436 = vmatpush1.xpose.msra.mxu0 0.0
    %437 = vmatprep.subr.mxu0 0.0
    %438 = vmatpush1.xpose.msra.mxu0 0.0
    %439 = vmatprep.subr.mxu0 0.0
    %440 = vmatpush1.xpose.msra.mxu0 0.0
    %441 = vmatprep.subr.mxu0 0.0
    %442 = vmatpush1.xpose.msra.mxu0 0.0
    %443 = vmatprep.subr.mxu0 0.0
    %444 = vmatpush1.xpose.msra.mxu0 0.0
    %445 = vmatprep.subr.mxu0 0.0
    %446 = vmatpush1.xpose.msra.mxu0 0.0
    %447 = vmatprep.mubr.f32.mxu0 0.0
    %448 = vmatmul.mubr.f32.gmra.mrb[0].mxu0 %v378
    %v449 = vpop.f32.mrb[0].mxu0
    %v450 = vadd.f32 0.0, %v449
    %v451 = vpop.f32.mrb[0].mxu0
    %452 = vdwg.mxu0
    %v453 = vsel %vm300, %v374, -inf
    %454 = vmax.xlane.f32.xlu0 %v453
    %v455 = vpop.xlane.xlu0 %454
    %v456 = vsel %vm300, %v450, -inf
    %457 = vmax.xlane.f32.xlu0 %v456
    %v458 = vpop.xlane.xlu0 %457
    %v459 = vsub.f32 %v374, %v455
    %v460 = vsub.f32 %v450, %v458
    %v461 = vmul.f32 %v459, 1.442695
    %v462 = vpow.pop %v461
    %v463 = vmul.f32 %v460, 1.442695
    %v464 = vpow.pop %v463
    %v465 = vsel %vm300, %v462, 0.0
    %466 = vadd.xlane.f32.xlu0 %v465
    %v467 = vpop.xlane.xlu0 %466
    %v468 = vsel %vm300, %v464, 0.0
    %469 = vadd.xlane.f32.xlu0 %v468
    %v470 = vpop.xlane.xlu0 %469
    %v471 = vrcp.pop %v467
    %v472 = vrcp.pop %v470
    %v473 = vmul.f32 %v462, %v471
    %v474 = vmul.f32 %v464, %v472
    %v476 = vsel %vm300, %v473, 0
    %478 = vmatprep.subr.mxu0 0.0
    %479 = vmatpush1.msra.mxu0 %v292
    %480 = vmatprep.subr.mxu0 0.0
    %481 = vmatpush1.msra.mxu0 0.0
    %482 = vmatprep.subr.mxu0 0.0
    %483 = vmatpush1.msra.mxu0 0.0
    %484 = vmatprep.subr.mxu0 0.0
    %485 = vmatpush1.msra.mxu0 0.0
    %486 = vmatprep.subr.mxu0 0.0
    %487 = vmatpush1.msra.mxu0 0.0
    %488 = vmatprep.subr.mxu0 0.0
    %489 = vmatpush1.msra.mxu0 0.0
    %490 = vmatprep.subr.mxu0 0.0
    %491 = vmatpush1.msra.mxu0 0.0
    %492 = vmatprep.subr.mxu0 0.0
    %493 = vmatpush1.msra.mxu0 0.0
    %494 = vmatprep.subr.mxu0 0.0
    %495 = vmatpush1.msra.mxu0 0.0
    %496 = vmatprep.subr.mxu0 0.0
    %497 = vmatpush1.msra.mxu0 0.0
    %498 = vmatprep.subr.mxu0 0.0
    %499 = vmatpush1.msra.mxu0 0.0
    %500 = vmatprep.subr.mxu0 0.0
    %501 = vmatpush1.msra.mxu0 0.0
    %502 = vmatprep.subr.mxu0 0.0
    %503 = vmatpush1.msra.mxu0 0.0
    %504 = vmatprep.subr.mxu0 0.0
    %505 = vmatpush1.msra.mxu0 0.0
    %506 = vmatprep.subr.mxu0 0.0
    %507 = vmatpush1.msra.mxu0 0.0
    %508 = vmatprep.subr.mxu0 0.0
    %509 = vmatpush1.msra.mxu0 0.0
    %510 = vmatprep.subr.mxu0 0.0
    %511 = vmatpush1.msra.mxu0 0.0
    %512 = vmatprep.subr.mxu0 0.0
    %513 = vmatpush1.msra.mxu0 0.0
    %514 = vmatprep.subr.mxu0 0.0
    %515 = vmatpush1.msra.mxu0 0.0
    %516 = vmatprep.subr.mxu0 0.0
    %517 = vmatpush1.msra.mxu0 0.0
    %518 = vmatprep.subr.mxu0 0.0
    %519 = vmatpush1.msra.mxu0 0.0
    %520 = vmatprep.subr.mxu0 0.0
    %521 = vmatpush1.msra.mxu0 0.0
    %522 = vmatprep.subr.mxu0 0.0
    %523 = vmatpush1.msra.mxu0 0.0
    %524 = vmatprep.subr.mxu0 0.0
    %525 = vmatpush1.msra.mxu0 0.0
    %526 = vmatprep.subr.mxu0 0.0
    %527 = vmatpush1.msra.mxu0 0.0
    %528 = vmatprep.subr.mxu0 0.0
    %529 = vmatpush1.msra.mxu0 0.0
    %530 = vmatprep.subr.mxu0 0.0
    %531 = vmatpush1.msra.mxu0 0.0
    %532 = vmatprep.subr.mxu0 0.0
    %533 = vmatpush1.msra.mxu0 0.0
    %534 = vmatprep.subr.mxu0 0.0
    %535 = vmatpush1.msra.mxu0 0.0
    %536 = vmatprep.subr.mxu0 0.0
    %537 = vmatpush1.msra.mxu0 0.0
    %538 = vmatprep.subr.mxu0 0.0
    %539 = vmatpush1.msra.mxu0 0.0
    %540 = vmatprep.subr.mxu0 0.0
    %541 = vmatpush1.msra.mxu0 0.0
    %542 = vmatprep.mubr.f32.mxu0 0.0
    %543 = vmatmul.mubr.f32.gmra.mrb[0].mxu0 %v476
    %v544 = vpop.f32.mrb[0].mxu0
    %v545 = vadd.f32 0.0, %v544
    %v546 = vpop.f32.mrb[0].mxu0
    %547 = vdwg.mxu0
    %v549 = vsel %vm300, %v474, 0
    %551 = vmatprep.subr.mxu0 0.0
    %552 = vmatpush1.msra.mxu0 %v297
    %553 = vmatprep.subr.mxu0 0.0
    %554 = vmatpush1.msra.mxu0 0.0
    %555 = vmatprep.subr.mxu0 0.0
    %556 = vmatpush1.msra.mxu0 0.0
    %557 = vmatprep.subr.mxu0 0.0
    %558 = vmatpush1.msra.mxu0 0.0
    %559 = vmatprep.subr.mxu0 0.0
    %560 = vmatpush1.msra.mxu0 0.0
    %561 = vmatprep.subr.mxu0 0.0
    %562 = vmatpush1.msra.mxu0 0.0
    %563 = vmatprep.subr.mxu0 0.0
    %564 = vmatpush1.msra.mxu0 0.0
    %565 = vmatprep.subr.mxu0 0.0
    %566 = vmatpush1.msra.mxu0 0.0
    %567 = vmatprep.subr.mxu0 0.0
    %568 = vmatpush1.msra.mxu0 0.0
    %569 = vmatprep.subr.mxu0 0.0
    %570 = vmatpush1.msra.mxu0 0.0
    %571 = vmatprep.subr.mxu0 0.0
    %572 = vmatpush1.msra.mxu0 0.0
    %573 = vmatprep.subr.mxu0 0.0
    %574 = vmatpush1.msra.mxu0 0.0
    %575 = vmatprep.subr.mxu0 0.0
    %576 = vmatpush1.msra.mxu0 0.0
    %577 = vmatprep.subr.mxu0 0.0
    %578 = vmatpush1.msra.mxu0 0.0
    %579 = vmatprep.subr.mxu0 0.0
    %580 = vmatpush1.msra.mxu0 0.0
    %581 = vmatprep.subr.mxu0 0.0
    %582 = vmatpush1.msra.mxu0 0.0
    %583 = vmatprep.subr.mxu0 0.0
    %584 = vmatpush1.msra.mxu0 0.0
    %585 = vmatprep.subr.mxu0 0.0
    %586 = vmatpush1.msra.mxu0 0.0
    %587 = vmatprep.subr.mxu0 0.0
    %588 = vmatpush1.msra.mxu0 0.0
    %589 = vmatprep.subr.mxu0 0.0
    %590 = vmatpush1.msra.mxu0 0.0
    %591 = vmatprep.subr.mxu0 0.0
    %592 = vmatpush1.msra.mxu0 0.0
    %593 = vmatprep.subr.mxu0 0.0
    %594 = vmatpush1.msra.mxu0 0.0
    %595 = vmatprep.subr.mxu0 0.0
    %596 = vmatpush1.msra.mxu0 0.0
    %597 = vmatprep.subr.mxu0 0.0
    %598 = vmatpush1.msra.mxu0 0.0
    %599 = vmatprep.subr.mxu0 0.0
    %600 = vmatpush1.msra.mxu0 0.0
    %601 = vmatprep.subr.mxu0 0.0
    %602 = vmatpush1.msra.mxu0 0.0
    %603 = vmatprep.subr.mxu0 0.0
    %604 = vmatpush1.msra.mxu0 0.0
    %605 = vmatprep.subr.mxu0 0.0
    %606 = vmatpush1.msra.mxu0 0.0
    %607 = vmatprep.subr.mxu0 0.0
    %608 = vmatpush1.msra.mxu0 0.0
    %609 = vmatprep.subr.mxu0 0.0
    %610 = vmatpush1.msra.mxu0 0.0
    %611 = vmatprep.subr.mxu0 0.0
    %612 = vmatpush1.msra.mxu0 0.0
    %613 = vmatprep.subr.mxu0 0.0
    %614 = vmatpush1.msra.mxu0 0.0
    %615 = vmatprep.mubr.f32.mxu0 0.0
    %616 = vmatmul.mubr.f32.gmra.mrb[0].mxu0 %v549
    %v617 = vpop.f32.mrb[0].mxu0
    %v618 = vadd.f32 0.0, %v617
    %v619 = vpop.f32.mrb[0].mxu0
    %620 = vdwg.mxu0
    %v621 = vld [vmem:[%s7] sm:$0xff]
    %s622 = scalar_lea.vmem %s1, 32
    %v623 = vld [vmem:[%s622] sm:$0xff]
    %v624 = vld [vmem:[%s622 + $0x8] sm:$0xff]
    %v625 = vld [vmem:[%s622 + $0x10] sm:$0xff]
    %v626 = vld [vmem:[%s622 + $0x18] sm:$0xff]
    %s627 = scalar_lea.vmem %s2, 1
    %v628 = vld [vmem:[%s627] sm:$0x1]
    %v630 = vlaneseq
    %v631 = vshrl.u32 %v630, 7
    %v632 = vsub.s32 0, %v631
    %v633 = vrot.slane %v628, %v632
    %635 = vmatprep.subr.mxu0 0.0
    %636 = vmatpush1.msra.mxu0 %v623
    %637 = vmatprep.subr.mxu0 0.0
    %638 = vmatpush1.msra.mxu0 %v624
    %639 = vmatprep.subr.mxu0 0.0
    %640 = vmatpush1.msra.mxu0 %v625
    %641 = vmatprep.subr.mxu0 0.0
    %642 = vmatpush1.msra.mxu0 %v626
    %643 = vmatprep.subr.mxu0 0.0
    %644 = vmatpush1.msra.mxu0 0.0
    %645 = vmatprep.subr.mxu0 0.0
    %646 = vmatpush1.msra.mxu0 0.0
    %647 = vmatprep.subr.mxu0 0.0
    %648 = vmatpush1.msra.mxu0 0.0
    %649 = vmatprep.subr.mxu0 0.0
    %650 = vmatpush1.msra.mxu0 0.0
    %651 = vmatprep.subr.mxu0 0.0
    %652 = vmatpush1.msra.mxu0 0.0
    %653 = vmatprep.subr.mxu0 0.0
    %654 = vmatpush1.msra.mxu0 0.0
    %655 = vmatprep.subr.mxu0 0.0
    %656 = vmatpush1.msra.mxu0 0.0
    %657 = vmatprep.subr.mxu0 0.0
    %658 = vmatpush1.msra.mxu0 0.0
    %659 = vmatprep.subr.mxu0 0.0
    %660 = vmatpush1.msra.mxu0 0.0
    %661 = vmatprep.subr.mxu0 0.0
    %662 = vmatpush1.msra.mxu0 0.0
    %663 = vmatprep.subr.mxu0 0.0
    %664 = vmatpush1.msra.mxu0 0.0
    %665 = vmatprep.subr.mxu0 0.0
    %666 = vmatpush1.msra.mxu0 0.0
    %667 = vmatprep.subr.mxu0 0.0
    %668 = vmatpush1.msra.mxu0 0.0
    %669 = vmatprep.subr.mxu0 0.0
    %670 = vmatpush1.msra.mxu0 0.0
    %671 = vmatprep.subr.mxu0 0.0
    %672 = vmatpush1.msra.mxu0 0.0
    %673 = vmatprep.subr.mxu0 0.0
    %674 = vmatpush1.msra.mxu0 0.0
    %675 = vmatprep.subr.mxu0 0.0
    %676 = vmatpush1.msra.mxu0 0.0
    %677 = vmatprep.subr.mxu0 0.0
    %678 = vmatpush1.msra.mxu0 0.0
    %679 = vmatprep.subr.mxu0 0.0
    %680 = vmatpush1.msra.mxu0 0.0
    %681 = vmatprep.subr.mxu0 0.0
    %682 = vmatpush1.msra.mxu0 0.0
    %683 = vmatprep.subr.mxu0 0.0
    %684 = vmatpush1.msra.mxu0 0.0
    %685 = vmatprep.subr.mxu0 0.0
    %686 = vmatpush1.msra.mxu0 0.0
    %687 = vmatprep.subr.mxu0 0.0
    %688 = vmatpush1.msra.mxu0 0.0
    %689 = vmatprep.subr.mxu0 0.0
    %690 = vmatpush1.msra.mxu0 0.0
    %691 = vmatprep.subr.mxu0 0.0
    %692 = vmatpush1.msra.mxu0 0.0
    %693 = vmatprep.subr.mxu0 0.0
    %694 = vmatpush1.msra.mxu0 0.0
    %695 = vmatprep.subr.mxu0 0.0
    %696 = vmatpush1.msra.mxu0 0.0
    %697 = vmatprep.subr.mxu0 0.0
    %698 = vmatpush1.msra.mxu0 0.0
    %699 = vmatprep.mubr.f32.mxu0 0.0
    %700 = vmatmul.mubr.f32.gmra.mrb[0].mxu0 %v48
    %v701 = vpop.f32.mrb[0].mxu0
    %v702 = vadd.f32 %v633, %v701
    %v703 = vpop.f32.mrb[0].mxu0
    %704 = vmatprep.mubr.f32.mxu0 0.0
    %705 = vmatmul.mubr.f32.gmra.mrb[0].mxu0 %v51
    %v706 = vpop.f32.mrb[0].mxu0
    %v707 = vadd.f32 %v633, %v706
    %v708 = vpop.f32.mrb[0].mxu0
    %709 = vdwg.mxu0
    %s710 = scalar_lea.vmem %s3, 32
    %v711 = vld [vmem:[%s710] sm:$0xff]
    %v712 = vld [vmem:[%s710 + $0x8] sm:$0xff]
    %v713 = vld [vmem:[%s710 + $0x10] sm:$0xff]
    %v714 = vld [vmem:[%s710 + $0x18] sm:$0xff]
    %s715 = scalar_lea.vmem %s4, 1
    %v716 = vld [vmem:[%s715] sm:$0x1]
    %v718 = vlaneseq
    %v719 = vshrl.u32 %v718, 7
    %v720 = vsub.s32 0, %v719
    %v721 = vrot.slane %v716, %v720
    %723 = vmatprep.subr.mxu0 0.0
    %724 = vmatpush1.msra.mxu0 %v711
    %725 = vmatprep.subr.mxu0 0.0
    %726 = vmatpush1.msra.mxu0 %v712
    %727 = vmatprep.subr.mxu0 0.0
    %728 = vmatpush1.msra.mxu0 %v713
    %729 = vmatprep.subr.mxu0 0.0
    %730 = vmatpush1.msra.mxu0 %v714
    %731 = vmatprep.subr.mxu0 0.0
    %732 = vmatpush1.msra.mxu0 0.0
    %733 = vmatprep.subr.mxu0 0.0
    %734 = vmatpush1.msra.mxu0 0.0
    %735 = vmatprep.subr.mxu0 0.0
    %736 = vmatpush1.msra.mxu0 0.0
    %737 = vmatprep.subr.mxu0 0.0
    %738 = vmatpush1.msra.mxu0 0.0
    %739 = vmatprep.subr.mxu0 0.0
    %740 = vmatpush1.msra.mxu0 0.0
    %741 = vmatprep.subr.mxu0 0.0
    %742 = vmatpush1.msra.mxu0 0.0
    %743 = vmatprep.subr.mxu0 0.0
    %744 = vmatpush1.msra.mxu0 0.0
    %745 = vmatprep.subr.mxu0 0.0
    %746 = vmatpush1.msra.mxu0 0.0
    %747 = vmatprep.subr.mxu0 0.0
    %748 = vmatpush1.msra.mxu0 0.0
    %749 = vmatprep.subr.mxu0 0.0
    %750 = vmatpush1.msra.mxu0 0.0
    %751 = vmatprep.subr.mxu0 0.0
    %752 = vmatpush1.msra.mxu0 0.0
    %753 = vmatprep.subr.mxu0 0.0
    %754 = vmatpush1.msra.mxu0 0.0
    %755 = vmatprep.subr.mxu0 0.0
    %756 = vmatpush1.msra.mxu0 0.0
    %757 = vmatprep.subr.mxu0 0.0
    %758 = vmatpush1.msra.mxu0 0.0
    %759 = vmatprep.subr.mxu0 0.0
    %760 = vmatpush1.msra.mxu0 0.0
    %761 = vmatprep.subr.mxu0 0.0
    %762 = vmatpush1.msra.mxu0 0.0
    %763 = vmatprep.subr.mxu0 0.0
    %764 = vmatpush1.msra.mxu0 0.0
    %765 = vmatprep.subr.mxu0 0.0
    %766 = vmatpush1.msra.mxu0 0.0
    %767 = vmatprep.subr.mxu0 0.0
    %768 = vmatpush1.msra.mxu0 0.0
    %769 = vmatprep.subr.mxu0 0.0
    %770 = vmatpush1.msra.mxu0 0.0
    %771 = vmatprep.subr.mxu0 0.0
    %772 = vmatpush1.msra.mxu0 0.0
    %773 = vmatprep.subr.mxu0 0.0
    %774 = vmatpush1.msra.mxu0 0.0
    %775 = vmatprep.subr.mxu0 0.0
    %776 = vmatpush1.msra.mxu0 0.0
    %777 = vmatprep.subr.mxu0 0.0
    %778 = vmatpush1.msra.mxu0 0.0
    %779 = vmatprep.subr.mxu0 0.0
    %780 = vmatpush1.msra.mxu0 0.0
    %781 = vmatprep.subr.mxu0 0.0
    %782 = vmatpush1.msra.mxu0 0.0
    %783 = vmatprep.subr.mxu0 0.0
    %784 = vmatpush1.msra.mxu0 0.0
    %785 = vmatprep.subr.mxu0 0.0
    %786 = vmatpush1.msra.mxu0 0.0
    %787 = vmatprep.mubr.f32.mxu0 0.0
    %788 = vmatmul.mubr.f32.gmra.mrb[0].mxu0 %v48
    %v789 = vpop.f32.mrb[0].mxu0
    %v790 = vadd.f32 %v721, %v789
    %v791 = vpop.f32.mrb[0].mxu0
    %792 = vmatprep.mubr.f32.mxu0 0.0
    %793 = vmatmul.mubr.f32.gmra.mrb[0].mxu0 %v51
    %v794 = vpop.f32.mrb[0].mxu0
    %v795 = vadd.f32 %v721, %v794
    %v796 = vpop.f32.mrb[0].mxu0
    %797 = vdwg.mxu0
    %s798 = scalar_lea.vmem %s5, 32
    %v799 = vld [vmem:[%s798] sm:$0xff]
    %v800 = vld [vmem:[%s798 + $0x8] sm:$0xff]
    %v801 = vld [vmem:[%s798 + $0x10] sm:$0xff]
    %v802 = vld [vmem:[%s798 + $0x18] sm:$0xff]
    %s803 = scalar_lea.vmem %s6, 1
    %v804 = vld [vmem:[%s803] sm:$0x1]
    %v806 = vlaneseq
    %v807 = vshrl.u32 %v806, 7
    %v808 = vsub.s32 0, %v807
    %v809 = vrot.slane %v804, %v808
    %811 = vmatprep.subr.mxu0 0.0
    %812 = vmatpush1.msra.mxu0 %v799
    %813 = vmatprep.subr.mxu0 0.0
    %814 = vmatpush1.msra.mxu0 %v800
    %815 = vmatprep.subr.mxu0 0.0
    %816 = vmatpush1.msra.mxu0 %v801
    %817 = vmatprep.subr.mxu0 0.0
    %818 = vmatpush1.msra.mxu0 %v802
    %819 = vmatprep.subr.mxu0 0.0
    %820 = vmatpush1.msra.mxu0 0.0
    %821 = vmatprep.subr.mxu0 0.0
    %822 = vmatpush1.msra.mxu0 0.0
    %823 = vmatprep.subr.mxu0 0.0
    %824 = vmatpush1.msra.mxu0 0.0
    %825 = vmatprep.subr.mxu0 0.0
    %826 = vmatpush1.msra.mxu0 0.0
    %827 = vmatprep.subr.mxu0 0.0
    %828 = vmatpush1.msra.mxu0 0.0
    %829 = vmatprep.subr.mxu0 0.0
    %830 = vmatpush1.msra.mxu0 0.0
    %831 = vmatprep.subr.mxu0 0.0
    %832 = vmatpush1.msra.mxu0 0.0
    %833 = vmatprep.subr.mxu0 0.0
    %834 = vmatpush1.msra.mxu0 0.0
    %835 = vmatprep.subr.mxu0 0.0
    %836 = vmatpush1.msra.mxu0 0.0
    %837 = vmatprep.subr.mxu0 0.0
    %838 = vmatpush1.msra.mxu0 0.0
    %839 = vmatprep.subr.mxu0 0.0
    %840 = vmatpush1.msra.mxu0 0.0
    %841 = vmatprep.subr.mxu0 0.0
    %842 = vmatpush1.msra.mxu0 0.0
    %843 = vmatprep.subr.mxu0 0.0
    %844 = vmatpush1.msra.mxu0 0.0
    %845 = vmatprep.subr.mxu0 0.0
    %846 = vmatpush1.msra.mxu0 0.0
    %847 = vmatprep.subr.mxu0 0.0
    %848 = vmatpush1.msra.mxu0 0.0
    %849 = vmatprep.subr.mxu0 0.0
    %850 = vmatpush1.msra.mxu0 0.0
    %851 = vmatprep.subr.mxu0 0.0
    %852 = vmatpush1.msra.mxu0 0.0
    %853 = vmatprep.subr.mxu0 0.0
    %854 = vmatpush1.msra.mxu0 0.0
    %855 = vmatprep.subr.mxu0 0.0
    %856 = vmatpush1.msra.mxu0 0.0
    %857 = vmatprep.subr.mxu0 0.0
    %858 = vmatpush1.msra.mxu0 0.0
    %859 = vmatprep.subr.mxu0 0.0
    %860 = vmatpush1.msra.mxu0 0.0
    %861 = vmatprep.subr.mxu0 0.0
    %862 = vmatpush1.msra.mxu0 0.0
    %863 = vmatprep.subr.mxu0 0.0
    %864 = vmatpush1.msra.mxu0 0.0
    %865 = vmatprep.subr.mxu0 0.0
    %866 = vmatpush1.msra.mxu0 0.0
    %867 = vmatprep.subr.mxu0 0.0
    %868 = vmatpush1.msra.mxu0 0.0
    %869 = vmatprep.subr.mxu0 0.0
    %870 = vmatpush1.msra.mxu0 0.0
    %871 = vmatprep.subr.mxu0 0.0
    %872 = vmatpush1.msra.mxu0 0.0
    %873 = vmatprep.subr.mxu0 0.0
    %874 = vmatpush1.msra.mxu0 0.0
    %875 = vmatprep.mubr.f32.mxu0 0.0
    %876 = vmatmul.mubr.f32.gmra.mrb[0].mxu0 %v48
    %v877 = vpop.f32.mrb[0].mxu0
    %v878 = vadd.f32 %v809, %v877
    %v879 = vpop.f32.mrb[0].mxu0
    %880 = vmatprep.mubr.f32.mxu0 0.0
    %881 = vmatmul.mubr.f32.gmra.mrb[0].mxu0 %v51
    %v882 = vpop.f32.mrb[0].mxu0
    %v883 = vadd.f32 %v809, %v882
    %v884 = vpop.f32.mrb[0].mxu0
    %885 = vdwg.mxu0
    %v887 = vsel %vm300, %v702, 0
    %v890 = vsel %vm300, %v790, 0
    %892 = vmatprep.subr.mxu0 0.0
    %893 = vmatpush1.xpose.msra.mxu0 %v890
    %894 = vmatprep.subr.mxu0 0.0
    %895 = vmatpush1.xpose.msra.mxu0 0.0
    %896 = vmatprep.subr.mxu0 0.0
    %897 = vmatpush1.xpose.msra.mxu0 0.0
    %898 = vmatprep.subr.mxu0 0.0
    %899 = vmatpush1.xpose.msra.mxu0 0.0
    %900 = vmatprep.subr.mxu0 0.0
    %901 = vmatpush1.xpose.msra.mxu0 0.0
    %902 = vmatprep.subr.mxu0 0.0
    %903 = vmatpush1.xpose.msra.mxu0 0.0
    %904 = vmatprep.subr.mxu0 0.0
    %905 = vmatpush1.xpose.msra.mxu0 0.0
    %906 = vmatprep.subr.mxu0 0.0
    %907 = vmatpush1.xpose.msra.mxu0 0.0
    %908 = vmatprep.subr.mxu0 0.0
    %909 = vmatpush1.xpose.msra.mxu0 0.0
    %910 = vmatprep.subr.mxu0 0.0
    %911 = vmatpush1.xpose.msra.mxu0 0.0
    %912 = vmatprep.subr.mxu0 0.0
    %913 = vmatpush1.xpose.msra.mxu0 0.0
    %914 = vmatprep.subr.mxu0 0.0
    %915 = vmatpush1.xpose.msra.mxu0 0.0
    %916 = vmatprep.subr.mxu0 0.0
    %917 = vmatpush1.xpose.msra.mxu0 0.0
    %918 = vmatprep.subr.mxu0 0.0
    %919 = vmatpush1.xpose.msra.mxu0 0.0
    %920 = vmatprep.subr.mxu0 0.0
    %921 = vmatpush1.xpose.msra.mxu0 0.0
    %922 = vmatprep.subr.mxu0 0.0
    %923 = vmatpush1.xpose.msra.mxu0 0.0
    %924 = vmatprep.subr.mxu0 0.0
    %925 = vmatpush1.xpose.msra.mxu0 0.0
    %926 = vmatprep.subr.mxu0 0.0
    %927 = vmatpush1.xpose.msra.mxu0 0.0
    %928 = vmatprep.subr.mxu0 0.0
    %929 = vmatpush1.xpose.msra.mxu0 0.0
    %930 = vmatprep.subr.mxu0 0.0
    %931 = vmatpush1.xpose.msra.mxu0 0.0
    %932 = vmatprep.subr.mxu0 0.0
    %933 = vmatpush1.xpose.msra.mxu0 0.0
    %934 = vmatprep.subr.mxu0 0.0
    %935 = vmatpush1.xpose.msra.mxu0 0.0
    %936 = vmatprep.subr.mxu0 0.0
    %937 = vmatpush1.xpose.msra.mxu0 0.0
    %938 = vmatprep.subr.mxu0 0.0
    %939 = vmatpush1.xpose.msra.mxu0 0.0
    %940 = vmatprep.subr.mxu0 0.0
    %941 = vmatpush1.xpose.msra.mxu0 0.0
    %942 = vmatprep.subr.mxu0 0.0
    %943 = vmatpush1.xpose.msra.mxu0 0.0
    %944 = vmatprep.subr.mxu0 0.0
    %945 = vmatpush1.xpose.msra.mxu0 0.0
    %946 = vmatprep.subr.mxu0 0.0
    %947 = vmatpush1.xpose.msra.mxu0 0.0
    %948 = vmatprep.subr.mxu0 0.0
    %949 = vmatpush1.xpose.msra.mxu0 0.0
    %950 = vmatprep.subr.mxu0 0.0
    %951 = vmatpush1.xpose.msra.mxu0 0.0
    %952 = vmatprep.subr.mxu0 0.0
    %953 = vmatpush1.xpose.msra.mxu0 0.0
    %954 = vmatprep.subr.mxu0 0.0
    %955 = vmatpush1.xpose.msra.mxu0 0.0
    %956 = vmatprep.mubr.f32.mxu0 0.0
    %957 = vmatmul.mubr.f32.gmra.mrb[0].mxu0 %v887
    %v958 = vpop.f32.mrb[0].mxu0
    %v959 = vadd.f32 0.0, %v958
    %v960 = vpop.f32.mrb[0].mxu0
    %961 = vdwg.mxu0
    %v963 = vsel %vm300, %v707, 0
    %v966 = vsel %vm300, %v795, 0
    %968 = vmatprep.subr.mxu0 0.0
    %969 = vmatpush1.xpose.msra.mxu0 %v966
    %970 = vmatprep.subr.mxu0 0.0
    %971 = vmatpush1.xpose.msra.mxu0 0.0
    %972 = vmatprep.subr.mxu0 0.0
    %973 = vmatpush1.xpose.msra.mxu0 0.0
    %974 = vmatprep.subr.mxu0 0.0
    %975 = vmatpush1.xpose.msra.mxu0 0.0
    %976 = vmatprep.subr.mxu0 0.0
    %977 = vmatpush1.xpose.msra.mxu0 0.0
    %978 = vmatprep.subr.mxu0 0.0
    %979 = vmatpush1.xpose.msra.mxu0 0.0
    %980 = vmatprep.subr.mxu0 0.0
    %981 = vmatpush1.xpose.msra.mxu0 0.0
    %982 = vmatprep.subr.mxu0 0.0
    %983 = vmatpush1.xpose.msra.mxu0 0.0
    %984 = vmatprep.subr.mxu0 0.0
    %985 = vmatpush1.xpose.msra.mxu0 0.0
    %986 = vmatprep.subr.mxu0 0.0
    %987 = vmatpush1.xpose.msra.mxu0 0.0
    %988 = vmatprep.subr.mxu0 0.0
    %989 = vmatpush1.xpose.msra.mxu0 0.0
    %990 = vmatprep.subr.mxu0 0.0
    %991 = vmatpush1.xpose.msra.mxu0 0.0
    %992 = vmatprep.subr.mxu0 0.0
    %993 = vmatpush1.xpose.msra.mxu0 0.0
    %994 = vmatprep.subr.mxu0 0.0
    %995 = vmatpush1.xpose.msra.mxu0 0.0
    %996 = vmatprep.subr.mxu0 0.0
    %997 = vmatpush1.xpose.msra.mxu0 0.0
    %998 = vmatprep.subr.mxu0 0.0
    %999 = vmatpush1.xpose.msra.mxu0 0.0
    %1000 = vmatprep.subr.mxu0 0.0
    %1001 = vmatpush1.xpose.msra.mxu0 0.0
    %1002 = vmatprep.subr.mxu0 0.0
    %1003 = vmatpush1.xpose.msra.mxu0 0.0
    %1004 = vmatprep.subr.mxu0 0.0
    %1005 = vmatpush1.xpose.msra.mxu0 0.0
    %1006 = vmatprep.subr.mxu0 0.0
    %1007 = vmatpush1.xpose.msra.mxu0 0.0
    %1008 = vmatprep.subr.mxu0 0.0
    %1009 = vmatpush1.xpose.msra.mxu0 0.0
    %1010 = vmatprep.subr.mxu0 0.0
    %1011 = vmatpush1.xpose.msra.mxu0 0.0
    %1012 = vmatprep.subr.mxu0 0.0
    %1013 = vmatpush1.xpose.msra.mxu0 0.0
    %1014 = vmatprep.subr.mxu0 0.0
    %1015 = vmatpush1.xpose.msra.mxu0 0.0
    %1016 = vmatprep.subr.mxu0 0.0
    %1017 = vmatpush1.xpose.msra.mxu0 0.0
    %1018 = vmatprep.subr.mxu0 0.0
    %1019 = vmatpush1.xpose.msra.mxu0 0.0
    %1020 = vmatprep.subr.mxu0 0.0
    %1021 = vmatpush1.xpose.msra.mxu0 0.0
    %1022 = vmatprep.subr.mxu0 0.0
    %1023 = vmatpush1.xpose.msra.mxu0 0.0
    %1024 = vmatprep.subr.mxu0 0.0
    %1025 = vmatpush1.xpose.msra.mxu0 0.0
    %1026 = vmatprep.subr.mxu0 0.0
    %1027 = vmatpush1.xpose.msra.mxu0 0.0
    %1028 = vmatprep.subr.mxu0 0.0
    %1029 = vmatpush1.xpose.msra.mxu0 0.0
    %1030 = vmatprep.subr.mxu0 0.0
    %1031 = vmatpush1.xpose.msra.mxu0 0.0
    %1032 = vmatprep.mubr.f32.mxu0 0.0
    %1033 = vmatmul.mubr.f32.gmra.mrb[0].mxu0 %v963
    %v1034 = vpop.f32.mrb[0].mxu0
    %v1035 = vadd.f32 0.0, %v1034
    %v1036 = vpop.f32.mrb[0].mxu0
    %1037 = vdwg.mxu0
    %v1038 = vsel %vm300, %v959, -inf
    %1039 = vmax.xlane.f32.xlu0 %v1038
    %v1040 = vpop.xlane.xlu0 %1039
    %v1041 = vsel %vm300, %v1035, -inf
    %1042 = vmax.xlane.f32.xlu0 %v1041
    %v1043 = vpop.xlane.xlu0 %1042
    %v1044 = vsub.f32 %v959, %v1040
    %v1045 = vsub.f32 %v1035, %v1043
    %v1046 = vmul.f32 %v1044, 1.442695
    %v1047 = vpow.pop %v1046
    %v1048 = vmul.f32 %v1045, 1.442695
    %v1049 = vpow.pop %v1048
    %v1050 = vsel %vm300, %v1047, 0.0
    %1051 = vadd.xlane.f32.xlu0 %v1050
    %v1052 = vpop.xlane.xlu0 %1051
    %v1053 = vsel %vm300, %v1049, 0.0
    %1054 = vadd.xlane.f32.xlu0 %v1053
    %v1055 = vpop.xlane.xlu0 %1054
    %v1056 = vrcp.pop %v1052
    %v1057 = vrcp.pop %v1055
    %v1058 = vmul.f32 %v1047, %v1056
    %v1059 = vmul.f32 %v1049, %v1057
    %v1061 = vsel %vm300, %v1058, 0
    %1063 = vmatprep.subr.mxu0 0.0
    %1064 = vmatpush1.msra.mxu0 %v878
    %1065 = vmatprep.subr.mxu0 0.0
    %1066 = vmatpush1.msra.mxu0 0.0
    %1067 = vmatprep.subr.mxu0 0.0
    %1068 = vmatpush1.msra.mxu0 0.0
    %1069 = vmatprep.subr.mxu0 0.0
    %1070 = vmatpush1.msra.mxu0 0.0
    %1071 = vmatprep.subr.mxu0 0.0
    %1072 = vmatpush1.msra.mxu0 0.0
    %1073 = vmatprep.subr.mxu0 0.0
    %1074 = vmatpush1.msra.mxu0 0.0
    %1075 = vmatprep.subr.mxu0 0.0
    %1076 = vmatpush1.msra.mxu0 0.0
    %1077 = vmatprep.subr.mxu0 0.0
    %1078 = vmatpush1.msra.mxu0 0.0
    %1079 = vmatprep.subr.mxu0 0.0
    %1080 = vmatpush1.msra.mxu0 0.0
    %1081 = vmatprep.subr.mxu0 0.0
    %1082 = vmatpush1.msra.mxu0 0.0
    %1083 = vmatprep.subr.mxu0 0.0
    %1084 = vmatpush1.msra.mxu0 0.0
    %1085 = vmatprep.subr.mxu0 0.0
    %1086 = vmatpush1.msra.mxu0 0.0
    %1087 = vmatprep.subr.mxu0 0.0
    %1088 = vmatpush1.msra.mxu0 0.0
    %1089 = vmatprep.subr.mxu0 0.0
    %1090 = vmatpush1.msra.mxu0 0.0
    %1091 = vmatprep.subr.mxu0 0.0
    %1092 = vmatpush1.msra.mxu0 0.0
    %1093 = vmatprep.subr.mxu0 0.0
    %1094 = vmatpush1.msra.mxu0 0.0
    %1095 = vmatprep.subr.mxu0 0.0
    %1096 = vmatpush1.msra.mxu0 0.0
    %1097 = vmatprep.subr.mxu0 0.0
    %1098 = vmatpush1.msra.mxu0 0.0
    %1099 = vmatprep.subr.mxu0 0.0
    %1100 = vmatpush1.msra.mxu0 0.0
    %1101 = vmatprep.subr.mxu0 0.0
    %1102 = vmatpush1.msra.mxu0 0.0
    %1103 = vmatprep.subr.mxu0 0.0
    %1104 = vmatpush1.msra.mxu0 0.0
    %1105 = vmatprep.subr.mxu0 0.0
    %1106 = vmatpush1.msra.mxu0 0.0
    %1107 = vmatprep.subr.mxu0 0.0
    %1108 = vmatpush1.msra.mxu0 0.0
    %1109 = vmatprep.subr.mxu0 0.0
    %1110 = vmatpush1.msra.mxu0 0.0
    %1111 = vmatprep.subr.mxu0 0.0
    %1112 = vmatpush1.msra.mxu0 0.0
    %1113 = vmatprep.subr.mxu0 0.0
    %1114 = vmatpush1.msra.mxu0 0.0
    %1115 = vmatprep.subr.mxu0 0.0
    %1116 = vmatpush1.msra.mxu0 0.0
    %1117 = vmatprep.subr.mxu0 0.0
    %1118 = vmatpush1.msra.mxu0 0.0
    %1119 = vmatprep.subr.mxu0 0.0
    %1120 = vmatpush1.msra.mxu0 0.0
    %1121 = vmatprep.subr.mxu0 0.0
    %1122 = vmatpush1.msra.mxu0 0.0
    %1123 = vmatprep.subr.mxu0 0.0
    %1124 = vmatpush1.msra.mxu0 0.0
    %1125 = vmatprep.subr.mxu0 0.0
    %1126 = vmatpush1.msra.mxu0 0.0
    %1127 = vmatprep.mubr.f32.mxu0 0.0
    %1128 = vmatmul.mubr.f32.gmra.mrb[0].mxu0 %v1061
    %v1129 = vpop.f32.mrb[0].mxu0
    %v1130 = vadd.f32 0.0, %v1129
    %v1131 = vpop.f32.mrb[0].mxu0
    %1132 = vdwg.mxu0
    %v1134 = vsel %vm300, %v1059, 0
    %1136 = vmatprep.subr.mxu0 0.0
    %1137 = vmatpush1.msra.mxu0 %v883
    %1138 = vmatprep.subr.mxu0 0.0
    %1139 = vmatpush1.msra.mxu0 0.0
    %1140 = vmatprep.subr.mxu0 0.0
    %1141 = vmatpush1.msra.mxu0 0.0
    %1142 = vmatprep.subr.mxu0 0.0
    %1143 = vmatpush1.msra.mxu0 0.0
    %1144 = vmatprep.subr.mxu0 0.0
    %1145 = vmatpush1.msra.mxu0 0.0
    %1146 = vmatprep.subr.mxu0 0.0
    %1147 = vmatpush1.msra.mxu0 0.0
    %1148 = vmatprep.subr.mxu0 0.0
    %1149 = vmatpush1.msra.mxu0 0.0
    %1150 = vmatprep.subr.mxu0 0.0
    %1151 = vmatpush1.msra.mxu0 0.0
    %1152 = vmatprep.subr.mxu0 0.0
    %1153 = vmatpush1.msra.mxu0 0.0
    %1154 = vmatprep.subr.mxu0 0.0
    %1155 = vmatpush1.msra.mxu0 0.0
    %1156 = vmatprep.subr.mxu0 0.0
    %1157 = vmatpush1.msra.mxu0 0.0
    %1158 = vmatprep.subr.mxu0 0.0
    %1159 = vmatpush1.msra.mxu0 0.0
    %1160 = vmatprep.subr.mxu0 0.0
    %1161 = vmatpush1.msra.mxu0 0.0
    %1162 = vmatprep.subr.mxu0 0.0
    %1163 = vmatpush1.msra.mxu0 0.0
    %1164 = vmatprep.subr.mxu0 0.0
    %1165 = vmatpush1.msra.mxu0 0.0
    %1166 = vmatprep.subr.mxu0 0.0
    %1167 = vmatpush1.msra.mxu0 0.0
    %1168 = vmatprep.subr.mxu0 0.0
    %1169 = vmatpush1.msra.mxu0 0.0
    %1170 = vmatprep.subr.mxu0 0.0
    %1171 = vmatpush1.msra.mxu0 0.0
    %1172 = vmatprep.subr.mxu0 0.0
    %1173 = vmatpush1.msra.mxu0 0.0
    %1174 = vmatprep.subr.mxu0 0.0
    %1175 = vmatpush1.msra.mxu0 0.0
    %1176 = vmatprep.subr.mxu0 0.0
    %1177 = vmatpush1.msra.mxu0 0.0
    %1178 = vmatprep.subr.mxu0 0.0
    %1179 = vmatpush1.msra.mxu0 0.0
    %1180 = vmatprep.subr.mxu0 0.0
    %1181 = vmatpush1.msra.mxu0 0.0
    %1182 = vmatprep.subr.mxu0 0.0
    %1183 = vmatpush1.msra.mxu0 0.0
    %1184 = vmatprep.subr.mxu0 0.0
    %1185 = vmatpush1.msra.mxu0 0.0
    %1186 = vmatprep.subr.mxu0 0.0
    %1187 = vmatpush1.msra.mxu0 0.0
    %1188 = vmatprep.subr.mxu0 0.0
    %1189 = vmatpush1.msra.mxu0 0.0
    %1190 = vmatprep.subr.mxu0 0.0
    %1191 = vmatpush1.msra.mxu0 0.0
    %1192 = vmatprep.subr.mxu0 0.0
    %1193 = vmatpush1.msra.mxu0 0.0
    %1194 = vmatprep.subr.mxu0 0.0
    %1195 = vmatpush1.msra.mxu0 0.0
    %1196 = vmatprep.subr.mxu0 0.0
    %1197 = vmatpush1.msra.mxu0 0.0
    %1198 = vmatprep.subr.mxu0 0.0
    %1199 = vmatpush1.msra.mxu0 0.0
    %1200 = vmatprep.mubr.f32.mxu0 0.0
    %1201 = vmatmul.mubr.f32.gmra.mrb[0].mxu0 %v1134
    %v1202 = vpop.f32.mrb[0].mxu0
    %v1203 = vadd.f32 0.0, %v1202
    %v1204 = vpop.f32.mrb[0].mxu0
    %1205 = vdwg.mxu0
    %s1206 = scalar_lea.vmem %s7, 8
    %v1207 = vld [vmem:[%s1206] sm:$0xff]
    %v1209 = vsel %vm300, %v1130, 0
    %v1212 = vsel %vm300, %v1203, 0
    %1214 = vmatprep.subr.mxu0 0.0
    %1215 = vmatpush1.msra.mxu0 %v1207
    %1216 = vmatprep.subr.mxu0 0.0
    %1217 = vmatpush1.msra.mxu0 0.0
    %1218 = vmatprep.subr.mxu0 0.0
    %1219 = vmatpush1.msra.mxu0 0.0
    %1220 = vmatprep.subr.mxu0 0.0
    %1221 = vmatpush1.msra.mxu0 0.0
    %1222 = vmatprep.subr.mxu0 0.0
    %1223 = vmatpush1.msra.mxu0 0.0
    %1224 = vmatprep.subr.mxu0 0.0
    %1225 = vmatpush1.msra.mxu0 0.0
    %1226 = vmatprep.subr.mxu0 0.0
    %1227 = vmatpush1.msra.mxu0 0.0
    %1228 = vmatprep.subr.mxu0 0.0
    %1229 = vmatpush1.msra.mxu0 0.0
    %1230 = vmatprep.subr.mxu0 0.0
    %1231 = vmatpush1.msra.mxu0 0.0
    %1232 = vmatprep.subr.mxu0 0.0
    %1233 = vmatpush1.msra.mxu0 0.0
    %1234 = vmatprep.subr.mxu0 0.0
    %1235 = vmatpush1.msra.mxu0 0.0
    %1236 = vmatprep.subr.mxu0 0.0
    %1237 = vmatpush1.msra.mxu0 0.0
    %1238 = vmatprep.subr.mxu0 0.0
    %1239 = vmatpush1.msra.mxu0 0.0
    %1240 = vmatprep.subr.mxu0 0.0
    %1241 = vmatpush1.msra.mxu0 0.0
    %1242 = vmatprep.subr.mxu0 0.0
    %1243 = vmatpush1.msra.mxu0 0.0
    %1244 = vmatprep.subr.mxu0 0.0
    %1245 = vmatpush1.msra.mxu0 0.0
    %1246 = vmatprep.subr.mxu0 0.0
    %1247 = vmatpush1.msra.mxu0 0.0
    %1248 = vmatprep.subr.mxu0 0.0
    %1249 = vmatpush1.msra.mxu0 0.0
    %1250 = vmatprep.subr.mxu0 0.0
    %1251 = vmatpush1.msra.mxu0 0.0
    %1252 = vmatprep.subr.mxu0 0.0
    %1253 = vmatpush1.msra.mxu0 0.0
    %1254 = vmatprep.subr.mxu0 0.0
    %1255 = vmatpush1.msra.mxu0 0.0
    %1256 = vmatprep.subr.mxu0 0.0
    %1257 = vmatpush1.msra.mxu0 0.0
    %1258 = vmatprep.subr.mxu0 0.0
    %1259 = vmatpush1.msra.mxu0 0.0
    %1260 = vmatprep.subr.mxu0 0.0
    %1261 = vmatpush1.msra.mxu0 0.0
    %1262 = vmatprep.subr.mxu0 0.0
    %1263 = vmatpush1.msra.mxu0 0.0
    %1264 = vmatprep.subr.mxu0 0.0
    %1265 = vmatpush1.msra.mxu0 0.0
    %1266 = vmatprep.subr.mxu0 0.0
    %1267 = vmatpush1.msra.mxu0 0.0
    %1268 = vmatprep.subr.mxu0 0.0
    %1269 = vmatpush1.msra.mxu0 0.0
    %1270 = vmatprep.subr.mxu0 0.0
    %1271 = vmatpush1.msra.mxu0 0.0
    %1272 = vmatprep.subr.mxu0 0.0
    %1273 = vmatpush1.msra.mxu0 0.0
    %1274 = vmatprep.subr.mxu0 0.0
    %1275 = vmatpush1.msra.mxu0 0.0
    %1276 = vmatprep.subr.mxu0 0.0
    %1277 = vmatpush1.msra.mxu0 0.0
    %1278 = vmatprep.mubr.f32.mxu0 0.0
    %1279 = vmatmul.mubr.f32.gmra.mrb[0].mxu0 %v1209
    %v1280 = vpop.f32.mrb[0].mxu0
    %v1281 = vadd.f32 0.0, %v1280
    %v1282 = vpop.f32.mrb[0].mxu0
    %1283 = vmatprep.mubr.f32.mxu0 0.0
    %1284 = vmatmul.mubr.f32.gmra.mrb[0].mxu0 %v1212
    %v1285 = vpop.f32.mrb[0].mxu0
    %v1286 = vadd.f32 0.0, %v1285
    %v1287 = vpop.f32.mrb[0].mxu0
    %1288 = vdwg.mxu0
    %v1290 = vsel %vm300, %v545, 0
    %v1293 = vsel %vm300, %v618, 0
    %1295 = vmatprep.subr.mxu0 0.0
    %1296 = vmatpush1.msra.mxu0 %v621
    %1297 = vmatprep.subr.mxu0 0.0
    %1298 = vmatpush1.msra.mxu0 0.0
    %1299 = vmatprep.subr.mxu0 0.0
    %1300 = vmatpush1.msra.mxu0 0.0
    %1301 = vmatprep.subr.mxu0 0.0
    %1302 = vmatpush1.msra.mxu0 0.0
    %1303 = vmatprep.subr.mxu0 0.0
    %1304 = vmatpush1.msra.mxu0 0.0
    %1305 = vmatprep.subr.mxu0 0.0
    %1306 = vmatpush1.msra.mxu0 0.0
    %1307 = vmatprep.subr.mxu0 0.0
    %1308 = vmatpush1.msra.mxu0 0.0
    %1309 = vmatprep.subr.mxu0 0.0
    %1310 = vmatpush1.msra.mxu0 0.0
    %1311 = vmatprep.subr.mxu0 0.0
    %1312 = vmatpush1.msra.mxu0 0.0
    %1313 = vmatprep.subr.mxu0 0.0
    %1314 = vmatpush1.msra.mxu0 0.0
    %1315 = vmatprep.subr.mxu0 0.0
    %1316 = vmatpush1.msra.mxu0 0.0
    %1317 = vmatprep.subr.mxu0 0.0
    %1318 = vmatpush1.msra.mxu0 0.0
    %1319 = vmatprep.subr.mxu0 0.0
    %1320 = vmatpush1.msra.mxu0 0.0
    %1321 = vmatprep.subr.mxu0 0.0
    %1322 = vmatpush1.msra.mxu0 0.0
    %1323 = vmatprep.subr.mxu0 0.0
    %1324 = vmatpush1.msra.mxu0 0.0
    %1325 = vmatprep.subr.mxu0 0.0
    %1326 = vmatpush1.msra.mxu0 0.0
    %1327 = vmatprep.subr.mxu0 0.0
    %1328 = vmatpush1.msra.mxu0 0.0
    %1329 = vmatprep.subr.mxu0 0.0
    %1330 = vmatpush1.msra.mxu0 0.0
    %1331 = vmatprep.subr.mxu0 0.0
    %1332 = vmatpush1.msra.mxu0 0.0
    %1333 = vmatprep.subr.mxu0 0.0
    %1334 = vmatpush1.msra.mxu0 0.0
    %1335 = vmatprep.subr.mxu0 0.0
    %1336 = vmatpush1.msra.mxu0 0.0
    %1337 = vmatprep.subr.mxu0 0.0
    %1338 = vmatpush1.msra.mxu0 0.0
    %1339 = vmatprep.subr.mxu0 0.0
    %1340 = vmatpush1.msra.mxu0 0.0
    %1341 = vmatprep.subr.mxu0 0.0
    %1342 = vmatpush1.msra.mxu0 0.0
    %1343 = vmatprep.subr.mxu0 0.0
    %1344 = vmatpush1.msra.mxu0 0.0
    %1345 = vmatprep.subr.mxu0 0.0
    %1346 = vmatpush1.msra.mxu0 0.0
    %1347 = vmatprep.subr.mxu0 0.0
    %1348 = vmatpush1.msra.mxu0 0.0
    %1349 = vmatprep.subr.mxu0 0.0
    %1350 = vmatpush1.msra.mxu0 0.0
    %1351 = vmatprep.subr.mxu0 0.0
    %1352 = vmatpush1.msra.mxu0 0.0
    %1353 = vmatprep.subr.mxu0 0.0
    %1354 = vmatpush1.msra.mxu0 0.0
    %1355 = vmatprep.subr.mxu0 0.0
    %1356 = vmatpush1.msra.mxu0 0.0
    %1357 = vmatprep.subr.mxu0 0.0
    %1358 = vmatpush1.msra.mxu0 0.0
    %1359 = vmatprep.mubr.f32.mxu0 0.0
    %1360 = vmatmul.mubr.f32.gmra.mrb[0].mxu0 %v1290
    %v1361 = vpop.f32.mrb[0].mxu0
    %v1362 = vadd.f32 %v1281, %v1361
    %v1363 = vpop.f32.mrb[0].mxu0
    %1364 = vmatprep.mubr.f32.mxu0 0.0
    %1365 = vmatmul.mubr.f32.gmra.mrb[0].mxu0 %v1293
    %v1366 = vpop.f32.mrb[0].mxu0
    %v1367 = vadd.f32 %v1286, %v1366
    %v1368 = vpop.f32.mrb[0].mxu0
    %1369 = vdwg.mxu0
    %s1370 = scalar_lea.vmem %s1, 64
    %v1371 = vld [vmem:[%s1370] sm:$0xff]
    %v1372 = vld [vmem:[%s1370 + $0x8] sm:$0xff]
    %v1373 = vld [vmem:[%s1370 + $0x10] sm:$0xff]
    %v1374 = vld [vmem:[%s1370 + $0x18] sm:$0xff]
    %s1375 = scalar_lea.vmem %s2, 2
    %v1376 = vld [vmem:[%s1375] sm:$0x1]
    %v1378 = vlaneseq
    %v1379 = vshrl.u32 %v1378, 7
    %v1380 = vsub.s32 0, %v1379
    %v1381 = vrot.slane %v1376, %v1380
    %1383 = vmatprep.subr.mxu0 0.0
    %1384 = vmatpush1.msra.mxu0 %v1371
    %1385 = vmatprep.subr.mxu0 0.0
    %1386 = vmatpush1.msra.mxu0 %v1372
    %1387 = vmatprep.subr.mxu0 0.0
    %1388 = vmatpush1.msra.mxu0 %v1373
    %1389 = vmatprep.subr.mxu0 0.0
    %1390 = vmatpush1.msra.mxu0 %v1374
    %1391 = vmatprep.subr.mxu0 0.0
    %1392 = vmatpush1.msra.mxu0 0.0
    %1393 = vmatprep.subr.mxu0 0.0
    %1394 = vmatpush1.msra.mxu0 0.0
    %1395 = vmatprep.subr.mxu0 0.0
    %1396 = vmatpush1.msra.mxu0 0.0
    %1397 = vmatprep.subr.mxu0 0.0
    %1398 = vmatpush1.msra.mxu0 0.0
    %1399 = vmatprep.subr.mxu0 0.0
    %1400 = vmatpush1.msra.mxu0 0.0
    %1401 = vmatprep.subr.mxu0 0.0
    %1402 = vmatpush1.msra.mxu0 0.0
    %1403 = vmatprep.subr.mxu0 0.0
    %1404 = vmatpush1.msra.mxu0 0.0
    %1405 = vmatprep.subr.mxu0 0.0
    %1406 = vmatpush1.msra.mxu0 0.0
    %1407 = vmatprep.subr.mxu0 0.0
    %1408 = vmatpush1.msra.mxu0 0.0
    %1409 = vmatprep.subr.mxu0 0.0
    %1410 = vmatpush1.msra.mxu0 0.0
    %1411 = vmatprep.subr.mxu0 0.0
    %1412 = vmatpush1.msra.mxu0 0.0
    %1413 = vmatprep.subr.mxu0 0.0
    %1414 = vmatpush1.msra.mxu0 0.0
    %1415 = vmatprep.subr.mxu0 0.0
    %1416 = vmatpush1.msra.mxu0 0.0
    %1417 = vmatprep.subr.mxu0 0.0
    %1418 = vmatpush1.msra.mxu0 0.0
    %1419 = vmatprep.subr.mxu0 0.0
    %1420 = vmatpush1.msra.mxu0 0.0
    %1421 = vmatprep.subr.mxu0 0.0
    %1422 = vmatpush1.msra.mxu0 0.0
    %1423 = vmatprep.subr.mxu0 0.0
    %1424 = vmatpush1.msra.mxu0 0.0
    %1425 = vmatprep.subr.mxu0 0.0
    %1426 = vmatpush1.msra.mxu0 0.0
    %1427 = vmatprep.subr.mxu0 0.0
    %1428 = vmatpush1.msra.mxu0 0.0
    %1429 = vmatprep.subr.mxu0 0.0
    %1430 = vmatpush1.msra.mxu0 0.0
    %1431 = vmatprep.subr.mxu0 0.0
    %1432 = vmatpush1.msra.mxu0 0.0
    %1433 = vmatprep.subr.mxu0 0.0
    %1434 = vmatpush1.msra.mxu0 0.0
    %1435 = vmatprep.subr.mxu0 0.0
    %1436 = vmatpush1.msra.mxu0 0.0
    %1437 = vmatprep.subr.mxu0 0.0
    %1438 = vmatpush1.msra.mxu0 0.0
    %1439 = vmatprep.subr.mxu0 0.0
    %1440 = vmatpush1.msra.mxu0 0.0
    %1441 = vmatprep.subr.mxu0 0.0
    %1442 = vmatpush1.msra.mxu0 0.0
    %1443 = vmatprep.subr.mxu0 0.0
    %1444 = vmatpush1.msra.mxu0 0.0
    %1445 = vmatprep.subr.mxu0 0.0
    %1446 = vmatpush1.msra.mxu0 0.0
    %1447 = vmatprep.mubr.f32.mxu0 0.0
    %1448 = vmatmul.mubr.f32.gmra.mrb[0].mxu0 %v48
    %v1449 = vpop.f32.mrb[0].mxu0
    %v1450 = vadd.f32 %v1381, %v1449
    %v1451 = vpop.f32.mrb[0].mxu0
    %1452 = vmatprep.mubr.f32.mxu0 0.0
    %1453 = vmatmul.mubr.f32.gmra.mrb[0].mxu0 %v51
    %v1454 = vpop.f32.mrb[0].mxu0
    %v1455 = vadd.f32 %v1381, %v1454
    %v1456 = vpop.f32.mrb[0].mxu0
    %1457 = vdwg.mxu0
    %s1458 = scalar_lea.vmem %s3, 64
    %v1459 = vld [vmem:[%s1458] sm:$0xff]
    %v1460 = vld [vmem:[%s1458 + $0x8] sm:$0xff]
    %v1461 = vld [vmem:[%s1458 + $0x10] sm:$0xff]
    %v1462 = vld [vmem:[%s1458 + $0x18] sm:$0xff]
    %s1463 = scalar_lea.vmem %s4, 2
    %v1464 = vld [vmem:[%s1463] sm:$0x1]
    %v1466 = vlaneseq
    %v1467 = vshrl.u32 %v1466, 7
    %v1468 = vsub.s32 0, %v1467
    %v1469 = vrot.slane %v1464, %v1468
    %1471 = vmatprep.subr.mxu0 0.0
    %1472 = vmatpush1.msra.mxu0 %v1459
    %1473 = vmatprep.subr.mxu0 0.0
    %1474 = vmatpush1.msra.mxu0 %v1460
    %1475 = vmatprep.subr.mxu0 0.0
    %1476 = vmatpush1.msra.mxu0 %v1461
    %1477 = vmatprep.subr.mxu0 0.0
    %1478 = vmatpush1.msra.mxu0 %v1462
    %1479 = vmatprep.subr.mxu0 0.0
    %1480 = vmatpush1.msra.mxu0 0.0
    %1481 = vmatprep.subr.mxu0 0.0
    %1482 = vmatpush1.msra.mxu0 0.0
    %1483 = vmatprep.subr.mxu0 0.0
    %1484 = vmatpush1.msra.mxu0 0.0
    %1485 = vmatprep.subr.mxu0 0.0
    %1486 = vmatpush1.msra.mxu0 0.0
    %1487 = vmatprep.subr.mxu0 0.0
    %1488 = vmatpush1.msra.mxu0 0.0
    %1489 = vmatprep.subr.mxu0 0.0
    %1490 = vmatpush1.msra.mxu0 0.0
    %1491 = vmatprep.subr.mxu0 0.0
    %1492 = vmatpush1.msra.mxu0 0.0
    %1493 = vmatprep.subr.mxu0 0.0
    %1494 = vmatpush1.msra.mxu0 0.0
    %1495 = vmatprep.subr.mxu0 0.0
    %1496 = vmatpush1.msra.mxu0 0.0
    %1497 = vmatprep.subr.mxu0 0.0
    %1498 = vmatpush1.msra.mxu0 0.0
    %1499 = vmatprep.subr.mxu0 0.0
    %1500 = vmatpush1.msra.mxu0 0.0
    %1501 = vmatprep.subr.mxu0 0.0
    %1502 = vmatpush1.msra.mxu0 0.0
    %1503 = vmatprep.subr.mxu0 0.0
    %1504 = vmatpush1.msra.mxu0 0.0
    %1505 = vmatprep.subr.mxu0 0.0
    %1506 = vmatpush1.msra.mxu0 0.0
    %1507 = vmatprep.subr.mxu0 0.0
    %1508 = vmatpush1.msra.mxu0 0.0
    %1509 = vmatprep.subr.mxu0 0.0
    %1510 = vmatpush1.msra.mxu0 0.0
    %1511 = vmatprep.subr.mxu0 0.0
    %1512 = vmatpush1.msra.mxu0 0.0
    %1513 = vmatprep.subr.mxu0 0.0
    %1514 = vmatpush1.msra.mxu0 0.0
    %1515 = vmatprep.subr.mxu0 0.0
    %1516 = vmatpush1.msra.mxu0 0.0
    %1517 = vmatprep.subr.mxu0 0.0
    %1518 = vmatpush1.msra.mxu0 0.0
    %1519 = vmatprep.subr.mxu0 0.0
    %1520 = vmatpush1.msra.mxu0 0.0
    %1521 = vmatprep.subr.mxu0 0.0
    %1522 = vmatpush1.msra.mxu0 0.0
    %1523 = vmatprep.subr.mxu0 0.0
    %1524 = vmatpush1.msra.mxu0 0.0
    %1525 = vmatprep.subr.mxu0 0.0
    %1526 = vmatpush1.msra.mxu0 0.0
    %1527 = vmatprep.subr.mxu0 0.0
    %1528 = vmatpush1.msra.mxu0 0.0
    %1529 = vmatprep.subr.mxu0 0.0
    %1530 = vmatpush1.msra.mxu0 0.0
    %1531 = vmatprep.subr.mxu0 0.0
    %1532 = vmatpush1.msra.mxu0 0.0
    %1533 = vmatprep.subr.mxu0 0.0
    %1534 = vmatpush1.msra.mxu0 0.0
    %1535 = vmatprep.mubr.f32.mxu0 0.0
    %1536 = vmatmul.mubr.f32.gmra.mrb[0].mxu0 %v48
    %v1537 = vpop.f32.mrb[0].mxu0
    %v1538 = vadd.f32 %v1469, %v1537
    %v1539 = vpop.f32.mrb[0].mxu0
    %1540 = vmatprep.mubr.f32.mxu0 0.0
    %1541 = vmatmul.mubr.f32.gmra.mrb[0].mxu0 %v51
    %v1542 = vpop.f32.mrb[0].mxu0
    %v1543 = vadd.f32 %v1469, %v1542
    %v1544 = vpop.f32.mrb[0].mxu0
    %1545 = vdwg.mxu0
    %s1546 = scalar_lea.vmem %s5, 64
    %v1547 = vld [vmem:[%s1546] sm:$0xff]
    %v1548 = vld [vmem:[%s1546 + $0x8] sm:$0xff]
    %v1549 = vld [vmem:[%s1546 + $0x10] sm:$0xff]
    %v1550 = vld [vmem:[%s1546 + $0x18] sm:$0xff]
    %s1551 = scalar_lea.vmem %s6, 2
    %v1552 = vld [vmem:[%s1551] sm:$0x1]
    %v1554 = vlaneseq
    %v1555 = vshrl.u32 %v1554, 7
    %v1556 = vsub.s32 0, %v1555
    %v1557 = vrot.slane %v1552, %v1556
    %1559 = vmatprep.subr.mxu0 0.0
    %1560 = vmatpush1.msra.mxu0 %v1547
    %1561 = vmatprep.subr.mxu0 0.0
    %1562 = vmatpush1.msra.mxu0 %v1548
    %1563 = vmatprep.subr.mxu0 0.0
    %1564 = vmatpush1.msra.mxu0 %v1549
    %1565 = vmatprep.subr.mxu0 0.0
    %1566 = vmatpush1.msra.mxu0 %v1550
    %1567 = vmatprep.subr.mxu0 0.0
    %1568 = vmatpush1.msra.mxu0 0.0
    %1569 = vmatprep.subr.mxu0 0.0
    %1570 = vmatpush1.msra.mxu0 0.0
    %1571 = vmatprep.subr.mxu0 0.0
    %1572 = vmatpush1.msra.mxu0 0.0
    %1573 = vmatprep.subr.mxu0 0.0
    %1574 = vmatpush1.msra.mxu0 0.0
    %1575 = vmatprep.subr.mxu0 0.0
    %1576 = vmatpush1.msra.mxu0 0.0
    %1577 = vmatprep.subr.mxu0 0.0
    %1578 = vmatpush1.msra.mxu0 0.0
    %1579 = vmatprep.subr.mxu0 0.0
    %1580 = vmatpush1.msra.mxu0 0.0
    %1581 = vmatprep.subr.mxu0 0.0
    %1582 = vmatpush1.msra.mxu0 0.0
    %1583 = vmatprep.subr.mxu0 0.0
    %1584 = vmatpush1.msra.mxu0 0.0
    %1585 = vmatprep.subr.mxu0 0.0
    %1586 = vmatpush1.msra.mxu0 0.0
    %1587 = vmatprep.subr.mxu0 0.0
    %1588 = vmatpush1.msra.mxu0 0.0
    %1589 = vmatprep.subr.mxu0 0.0
    %1590 = vmatpush1.msra.mxu0 0.0
    %1591 = vmatprep.subr.mxu0 0.0
    %1592 = vmatpush1.msra.mxu0 0.0
    %1593 = vmatprep.subr.mxu0 0.0
    %1594 = vmatpush1.msra.mxu0 0.0
    %1595 = vmatprep.subr.mxu0 0.0
    %1596 = vmatpush1.msra.mxu0 0.0
    %1597 = vmatprep.subr.mxu0 0.0
    %1598 = vmatpush1.msra.mxu0 0.0
    %1599 = vmatprep.subr.mxu0 0.0
    %1600 = vmatpush1.msra.mxu0 0.0
    %1601 = vmatprep.subr.mxu0 0.0
    %1602 = vmatpush1.msra.mxu0 0.0
    %1603 = vmatprep.subr.mxu0 0.0
    %1604 = vmatpush1.msra.mxu0 0.0
    %1605 = vmatprep.subr.mxu0 0.0
    %1606 = vmatpush1.msra.mxu0 0.0
    %1607 = vmatprep.subr.mxu0 0.0
    %1608 = vmatpush1.msra.mxu0 0.0
    %1609 = vmatprep.subr.mxu0 0.0
    %1610 = vmatpush1.msra.mxu0 0.0
    %1611 = vmatprep.subr.mxu0 0.0
    %1612 = vmatpush1.msra.mxu0 0.0
    %1613 = vmatprep.subr.mxu0 0.0
    %1614 = vmatpush1.msra.mxu0 0.0
    %1615 = vmatprep.subr.mxu0 0.0
    %1616 = vmatpush1.msra.mxu0 0.0
    %1617 = vmatprep.subr.mxu0 0.0
    %1618 = vmatpush1.msra.mxu0 0.0
    %1619 = vmatprep.subr.mxu0 0.0
    %1620 = vmatpush1.msra.mxu0 0.0
    %1621 = vmatprep.subr.mxu0 0.0
    %1622 = vmatpush1.msra.mxu0 0.0
    %1623 = vmatprep.mubr.f32.mxu0 0.0
    %1624 = vmatmul.mubr.f32.gmra.mrb[0].mxu0 %v48
    %v1625 = vpop.f32.mrb[0].mxu0
    %v1626 = vadd.f32 %v1557, %v1625
    %v1627 = vpop.f32.mrb[0].mxu0
    %1628 = vmatprep.mubr.f32.mxu0 0.0
    %1629 = vmatmul.mubr.f32.gmra.mrb[0].mxu0 %v51
    %v1630 = vpop.f32.mrb[0].mxu0
    %v1631 = vadd.f32 %v1557, %v1630
    %v1632 = vpop.f32.mrb[0].mxu0
    %1633 = vdwg.mxu0
    %v1635 = vsel %vm300, %v1450, 0
    %v1638 = vsel %vm300, %v1538, 0
    %1640 = vmatprep.subr.mxu0 0.0
    %1641 = vmatpush1.xpose.msra.mxu0 %v1638
    %1642 = vmatprep.subr.mxu0 0.0
    %1643 = vmatpush1.xpose.msra.mxu0 0.0
    %1644 = vmatprep.subr.mxu0 0.0
    %1645 = vmatpush1.xpose.msra.mxu0 0.0
    %1646 = vmatprep.subr.mxu0 0.0
    %1647 = vmatpush1.xpose.msra.mxu0 0.0
    %1648 = vmatprep.subr.mxu0 0.0
    %1649 = vmatpush1.xpose.msra.mxu0 0.0
    %1650 = vmatprep.subr.mxu0 0.0
    %1651 = vmatpush1.xpose.msra.mxu0 0.0
    %1652 = vmatprep.subr.mxu0 0.0
    %1653 = vmatpush1.xpose.msra.mxu0 0.0
    %1654 = vmatprep.subr.mxu0 0.0
    %1655 = vmatpush1.xpose.msra.mxu0 0.0
    %1656 = vmatprep.subr.mxu0 0.0
    %1657 = vmatpush1.xpose.msra.mxu0 0.0
    %1658 = vmatprep.subr.mxu0 0.0
    %1659 = vmatpush1.xpose.msra.mxu0 0.0
    %1660 = vmatprep.subr.mxu0 0.0
    %1661 = vmatpush1.xpose.msra.mxu0 0.0
    %1662 = vmatprep.subr.mxu0 0.0
    %1663 = vmatpush1.xpose.msra.mxu0 0.0
    %1664 = vmatprep.subr.mxu0 0.0
    %1665 = vmatpush1.xpose.msra.mxu0 0.0
    %1666 = vmatprep.subr.mxu0 0.0
    %1667 = vmatpush1.xpose.msra.mxu0 0.0
    %1668 = vmatprep.subr.mxu0 0.0
    %1669 = vmatpush1.xpose.msra.mxu0 0.0
    %1670 = vmatprep.subr.mxu0 0.0
    %1671 = vmatpush1.xpose.msra.mxu0 0.0
    %1672 = vmatprep.subr.mxu0 0.0
    %1673 = vmatpush1.xpose.msra.mxu0 0.0
    %1674 = vmatprep.subr.mxu0 0.0
    %1675 = vmatpush1.xpose.msra.mxu0 0.0
    %1676 = vmatprep.subr.mxu0 0.0
    %1677 = vmatpush1.xpose.msra.mxu0 0.0
    %1678 = vmatprep.subr.mxu0 0.0
    %1679 = vmatpush1.xpose.msra.mxu0 0.0
    %1680 = vmatprep.subr.mxu0 0.0
    %1681 = vmatpush1.xpose.msra.mxu0 0.0
    %1682 = vmatprep.subr.mxu0 0.0
    %1683 = vmatpush1.xpose.msra.mxu0 0.0
    %1684 = vmatprep.subr.mxu0 0.0
    %1685 = vmatpush1.xpose.msra.mxu0 0.0
    %1686 = vmatprep.subr.mxu0 0.0
    %1687 = vmatpush1.xpose.msra.mxu0 0.0
    %1688 = vmatprep.subr.mxu0 0.0
    %1689 = vmatpush1.xpose.msra.mxu0 0.0
    %1690 = vmatprep.subr.mxu0 0.0
    %1691 = vmatpush1.xpose.msra.mxu0 0.0
    %1692 = vmatprep.subr.mxu0 0.0
    %1693 = vmatpush1.xpose.msra.mxu0 0.0
    %1694 = vmatprep.subr.mxu0 0.0
    %1695 = vmatpush1.xpose.msra.mxu0 0.0
    %1696 = vmatprep.subr.mxu0 0.0
    %1697 = vmatpush1.xpose.msra.mxu0 0.0
    %1698 = vmatprep.subr.mxu0 0.0
    %1699 = vmatpush1.xpose.msra.mxu0 0.0
    %1700 = vmatprep.subr.mxu0 0.0
    %1701 = vmatpush1.xpose.msra.mxu0 0.0
    %1702 = vmatprep.subr.mxu0 0.0
    %1703 = vmatpush1.xpose.msra.mxu0 0.0
    %1704 = vmatprep.mubr.f32.mxu0 0.0
    %1705 = vmatmul.mubr.f32.gmra.mrb[0].mxu0 %v1635
    %v1706 = vpop.f32.mrb[0].mxu0
    %v1707 = vadd.f32 0.0, %v1706
    %v1708 = vpop.f32.mrb[0].mxu0
    %1709 = vdwg.mxu0
    %v1711 = vsel %vm300, %v1455, 0
    %v1714 = vsel %vm300, %v1543, 0
    %1716 = vmatprep.subr.mxu0 0.0
    %1717 = vmatpush1.xpose.msra.mxu0 %v1714
    %1718 = vmatprep.subr.mxu0 0.0
    %1719 = vmatpush1.xpose.msra.mxu0 0.0
    %1720 = vmatprep.subr.mxu0 0.0
    %1721 = vmatpush1.xpose.msra.mxu0 0.0
    %1722 = vmatprep.subr.mxu0 0.0
    %1723 = vmatpush1.xpose.msra.mxu0 0.0
    %1724 = vmatprep.subr.mxu0 0.0
    %1725 = vmatpush1.xpose.msra.mxu0 0.0
    %1726 = vmatprep.subr.mxu0 0.0
    %1727 = vmatpush1.xpose.msra.mxu0 0.0
    %1728 = vmatprep.subr.mxu0 0.0
    %1729 = vmatpush1.xpose.msra.mxu0 0.0
    %1730 = vmatprep.subr.mxu0 0.0
    %1731 = vmatpush1.xpose.msra.mxu0 0.0
    %1732 = vmatprep.subr.mxu0 0.0
    %1733 = vmatpush1.xpose.msra.mxu0 0.0
    %1734 = vmatprep.subr.mxu0 0.0
    %1735 = vmatpush1.xpose.msra.mxu0 0.0
    %1736 = vmatprep.subr.mxu0 0.0
    %1737 = vmatpush1.xpose.msra.mxu0 0.0
    %1738 = vmatprep.subr.mxu0 0.0
    %1739 = vmatpush1.xpose.msra.mxu0 0.0
    %1740 = vmatprep.subr.mxu0 0.0
    %1741 = vmatpush1.xpose.msra.mxu0 0.0
    %1742 = vmatprep.subr.mxu0 0.0
    %1743 = vmatpush1.xpose.msra.mxu0 0.0
    %1744 = vmatprep.subr.mxu0 0.0
    %1745 = vmatpush1.xpose.msra.mxu0 0.0
    %1746 = vmatprep.subr.mxu0 0.0
    %1747 = vmatpush1.xpose.msra.mxu0 0.0
    %1748 = vmatprep.subr.mxu0 0.0
    %1749 = vmatpush1.xpose.msra.mxu0 0.0
    %1750 = vmatprep.subr.mxu0 0.0
    %1751 = vmatpush1.xpose.msra.mxu0 0.0
    %1752 = vmatprep.subr.mxu0 0.0
    %1753 = vmatpush1.xpose.msra.mxu0 0.0
    %1754 = vmatprep.subr.mxu0 0.0
    %1755 = vmatpush1.xpose.msra.mxu0 0.0
    %1756 = vmatprep.subr.mxu0 0.0
    %1757 = vmatpush1.xpose.msra.mxu0 0.0
    %1758 = vmatprep.subr.mxu0 0.0
    %1759 = vmatpush1.xpose.msra.mxu0 0.0
    %1760 = vmatprep.subr.mxu0 0.0
    %1761 = vmatpush1.xpose.msra.mxu0 0.0
    %1762 = vmatprep.subr.mxu0 0.0
    %1763 = vmatpush1.xpose.msra.mxu0 0.0
    %1764 = vmatprep.subr.mxu0 0.0
    %1765 = vmatpush1.xpose.msra.mxu0 0.0
    %1766 = vmatprep.subr.mxu0 0.0
    %1767 = vmatpush1.xpose.msra.mxu0 0.0
    %1768 = vmatprep.subr.mxu0 0.0
    %1769 = vmatpush1.xpose.msra.mxu0 0.0
    %1770 = vmatprep.subr.mxu0 0.0
    %1771 = vmatpush1.xpose.msra.mxu0 0.0
    %1772 = vmatprep.subr.mxu0 0.0
    %1773 = vmatpush1.xpose.msra.mxu0 0.0
    %1774 = vmatprep.subr.mxu0 0.0
    %1775 = vmatpush1.xpose.msra.mxu0 0.0
    %1776 = vmatprep.subr.mxu0 0.0
    %1777 = vmatpush1.xpose.msra.mxu0 0.0
    %1778 = vmatprep.subr.mxu0 0.0
    %1779 = vmatpush1.xpose.msra.mxu0 0.0
    %1780 = vmatprep.mubr.f32.mxu0 0.0
    %1781 = vmatmul.mubr.f32.gmra.mrb[0].mxu0 %v1711
    %v1782 = vpop.f32.mrb[0].mxu0
    %v1783 = vadd.f32 0.0, %v1782
    %v1784 = vpop.f32.mrb[0].mxu0
    %1785 = vdwg.mxu0
    %v1786 = vsel %vm300, %v1707, -inf
    %1787 = vmax.xlane.f32.xlu0 %v1786
    %v1788 = vpop.xlane.xlu0 %1787
    %v1789 = vsel %vm300, %v1783, -inf
    %1790 = vmax.xlane.f32.xlu0 %v1789
    %v1791 = vpop.xlane.xlu0 %1790
    %v1792 = vsub.f32 %v1707, %v1788
    %v1793 = vsub.f32 %v1783, %v1791
    %v1794 = vmul.f32 %v1792, 1.442695
    %v1795 = vpow.pop %v1794
    %v1796 = vmul.f32 %v1793, 1.442695
    %v1797 = vpow.pop %v1796
    %v1798 = vsel %vm300, %v1795, 0.0
    %1799 = vadd.xlane.f32.xlu0 %v1798
    %v1800 = vpop.xlane.xlu0 %1799
    %v1801 = vsel %vm300, %v1797, 0.0
    %1802 = vadd.xlane.f32.xlu0 %v1801
    %v1803 = vpop.xlane.xlu0 %1802
    %v1804 = vrcp.pop %v1800
    %v1805 = vrcp.pop %v1803
    %v1806 = vmul.f32 %v1795, %v1804
    %v1807 = vmul.f32 %v1797, %v1805
    %v1809 = vsel %vm300, %v1806, 0
    %1811 = vmatprep.subr.mxu0 0.0
    %1812 = vmatpush1.msra.mxu0 %v1626
    %1813 = vmatprep.subr.mxu0 0.0
    %1814 = vmatpush1.msra.mxu0 0.0
    %1815 = vmatprep.subr.mxu0 0.0
    %1816 = vmatpush1.msra.mxu0 0.0
    %1817 = vmatprep.subr.mxu0 0.0
    %1818 = vmatpush1.msra.mxu0 0.0
    %1819 = vmatprep.subr.mxu0 0.0
    %1820 = vmatpush1.msra.mxu0 0.0
    %1821 = vmatprep.subr.mxu0 0.0
    %1822 = vmatpush1.msra.mxu0 0.0
    %1823 = vmatprep.subr.mxu0 0.0
    %1824 = vmatpush1.msra.mxu0 0.0
    %1825 = vmatprep.subr.mxu0 0.0
    %1826 = vmatpush1.msra.mxu0 0.0
    %1827 = vmatprep.subr.mxu0 0.0
    %1828 = vmatpush1.msra.mxu0 0.0
    %1829 = vmatprep.subr.mxu0 0.0
    %1830 = vmatpush1.msra.mxu0 0.0
    %1831 = vmatprep.subr.mxu0 0.0
    %1832 = vmatpush1.msra.mxu0 0.0
    %1833 = vmatprep.subr.mxu0 0.0
    %1834 = vmatpush1.msra.mxu0 0.0
    %1835 = vmatprep.subr.mxu0 0.0
    %1836 = vmatpush1.msra.mxu0 0.0
    %1837 = vmatprep.subr.mxu0 0.0
    %1838 = vmatpush1.msra.mxu0 0.0
    %1839 = vmatprep.subr.mxu0 0.0
    %1840 = vmatpush1.msra.mxu0 0.0
    %1841 = vmatprep.subr.mxu0 0.0
    %1842 = vmatpush1.msra.mxu0 0.0
    %1843 = vmatprep.subr.mxu0 0.0
    %1844 = vmatpush1.msra.mxu0 0.0
    %1845 = vmatprep.subr.mxu0 0.0
    %1846 = vmatpush1.msra.mxu0 0.0
    %1847 = vmatprep.subr.mxu0 0.0
    %1848 = vmatpush1.msra.mxu0 0.0
    %1849 = vmatprep.subr.mxu0 0.0
    %1850 = vmatpush1.msra.mxu0 0.0
    %1851 = vmatprep.subr.mxu0 0.0
    %1852 = vmatpush1.msra.mxu0 0.0
    %1853 = vmatprep.subr.mxu0 0.0
    %1854 = vmatpush1.msra.mxu0 0.0
    %1855 = vmatprep.subr.mxu0 0.0
    %1856 = vmatpush1.msra.mxu0 0.0
    %1857 = vmatprep.subr.mxu0 0.0
    %1858 = vmatpush1.msra.mxu0 0.0
    %1859 = vmatprep.subr.mxu0 0.0
    %1860 = vmatpush1.msra.mxu0 0.0
    %1861 = vmatprep.subr.mxu0 0.0
    %1862 = vmatpush1.msra.mxu0 0.0
    %1863 = vmatprep.subr.mxu0 0.0
    %1864 = vmatpush1.msra.mxu0 0.0
    %1865 = vmatprep.subr.mxu0 0.0
    %1866 = vmatpush1.msra.mxu0 0.0
    %1867 = vmatprep.subr.mxu0 0.0
    %1868 = vmatpush1.msra.mxu0 0.0
    %1869 = vmatprep.subr.mxu0 0.0
    %1870 = vmatpush1.msra.mxu0 0.0
    %1871 = vmatprep.subr.mxu0 0.0
    %1872 = vmatpush1.msra.mxu0 0.0
    %1873 = vmatprep.subr.mxu0 0.0
    %1874 = vmatpush1.msra.mxu0 0.0
    %1875 = vmatprep.mubr.f32.mxu0 0.0
    %1876 = vmatmul.mubr.f32.gmra.mrb[0].mxu0 %v1809
    %v1877 = vpop.f32.mrb[0].mxu0
    %v1878 = vadd.f32 0.0, %v1877
    %v1879 = vpop.f32.mrb[0].mxu0
    %1880 = vdwg.mxu0
    %v1882 = vsel %vm300, %v1807, 0
    %1884 = vmatprep.subr.mxu0 0.0
    %1885 = vmatpush1.msra.mxu0 %v1631
    %1886 = vmatprep.subr.mxu0 0.0
    %1887 = vmatpush1.msra.mxu0 0.0
    %1888 = vmatprep.subr.mxu0 0.0
    %1889 = vmatpush1.msra.mxu0 0.0
    %1890 = vmatprep.subr.mxu0 0.0
    %1891 = vmatpush1.msra.mxu0 0.0
    %1892 = vmatprep.subr.mxu0 0.0
    %1893 = vmatpush1.msra.mxu0 0.0
    %1894 = vmatprep.subr.mxu0 0.0
    %1895 = vmatpush1.msra.mxu0 0.0
    %1896 = vmatprep.subr.mxu0 0.0
    %1897 = vmatpush1.msra.mxu0 0.0
    %1898 = vmatprep.subr.mxu0 0.0
    %1899 = vmatpush1.msra.mxu0 0.0
    %1900 = vmatprep.subr.mxu0 0.0
    %1901 = vmatpush1.msra.mxu0 0.0
    %1902 = vmatprep.subr.mxu0 0.0
    %1903 = vmatpush1.msra.mxu0 0.0
    %1904 = vmatprep.subr.mxu0 0.0
    %1905 = vmatpush1.msra.mxu0 0.0
    %1906 = vmatprep.subr.mxu0 0.0
    %1907 = vmatpush1.msra.mxu0 0.0
    %1908 = vmatprep.subr.mxu0 0.0
    %1909 = vmatpush1.msra.mxu0 0.0
    %1910 = vmatprep.subr.mxu0 0.0
    %1911 = vmatpush1.msra.mxu0 0.0
    %1912 = vmatprep.subr.mxu0 0.0
    %1913 = vmatpush1.msra.mxu0 0.0
    %1914 = vmatprep.subr.mxu0 0.0
    %1915 = vmatpush1.msra.mxu0 0.0
    %1916 = vmatprep.subr.mxu0 0.0
    %1917 = vmatpush1.msra.mxu0 0.0
    %1918 = vmatprep.subr.mxu0 0.0
    %1919 = vmatpush1.msra.mxu0 0.0
    %1920 = vmatprep.subr.mxu0 0.0
    %1921 = vmatpush1.msra.mxu0 0.0
    %1922 = vmatprep.subr.mxu0 0.0
    %1923 = vmatpush1.msra.mxu0 0.0
    %1924 = vmatprep.subr.mxu0 0.0
    %1925 = vmatpush1.msra.mxu0 0.0
    %1926 = vmatprep.subr.mxu0 0.0
    %1927 = vmatpush1.msra.mxu0 0.0
    %1928 = vmatprep.subr.mxu0 0.0
    %1929 = vmatpush1.msra.mxu0 0.0
    %1930 = vmatprep.subr.mxu0 0.0
    %1931 = vmatpush1.msra.mxu0 0.0
    %1932 = vmatprep.subr.mxu0 0.0
    %1933 = vmatpush1.msra.mxu0 0.0
    %1934 = vmatprep.subr.mxu0 0.0
    %1935 = vmatpush1.msra.mxu0 0.0
    %1936 = vmatprep.subr.mxu0 0.0
    %1937 = vmatpush1.msra.mxu0 0.0
    %1938 = vmatprep.subr.mxu0 0.0
    %1939 = vmatpush1.msra.mxu0 0.0
    %1940 = vmatprep.subr.mxu0 0.0
    %1941 = vmatpush1.msra.mxu0 0.0
    %1942 = vmatprep.subr.mxu0 0.0
    %1943 = vmatpush1.msra.mxu0 0.0
    %1944 = vmatprep.subr.mxu0 0.0
    %1945 = vmatpush1.msra.mxu0 0.0
    %1946 = vmatprep.subr.mxu0 0.0
    %1947 = vmatpush1.msra.mxu0 0.0
    %1948 = vmatprep.mubr.f32.mxu0 0.0
    %1949 = vmatmul.mubr.f32.gmra.mrb[0].mxu0 %v1882
    %v1950 = vpop.f32.mrb[0].mxu0
    %v1951 = vadd.f32 0.0, %v1950
    %v1952 = vpop.f32.mrb[0].mxu0
    %1953 = vdwg.mxu0
    %s1954 = scalar_lea.vmem %s7, 16
    %v1955 = vld [vmem:[%s1954] sm:$0xff]
    %v1957 = vsel %vm300, %v1878, 0
    %v1960 = vsel %vm300, %v1951, 0
    %1962 = vmatprep.subr.mxu0 0.0
    %1963 = vmatpush1.msra.mxu0 %v1955
    %1964 = vmatprep.subr.mxu0 0.0
    %1965 = vmatpush1.msra.mxu0 0.0
    %1966 = vmatprep.subr.mxu0 0.0
    %1967 = vmatpush1.msra.mxu0 0.0
    %1968 = vmatprep.subr.mxu0 0.0
    %1969 = vmatpush1.msra.mxu0 0.0
    %1970 = vmatprep.subr.mxu0 0.0
    %1971 = vmatpush1.msra.mxu0 0.0
    %1972 = vmatprep.subr.mxu0 0.0
    %1973 = vmatpush1.msra.mxu0 0.0
    %1974 = vmatprep.subr.mxu0 0.0
    %1975 = vmatpush1.msra.mxu0 0.0
    %1976 = vmatprep.subr.mxu0 0.0
    %1977 = vmatpush1.msra.mxu0 0.0
    %1978 = vmatprep.subr.mxu0 0.0
    %1979 = vmatpush1.msra.mxu0 0.0
    %1980 = vmatprep.subr.mxu0 0.0
    %1981 = vmatpush1.msra.mxu0 0.0
    %1982 = vmatprep.subr.mxu0 0.0
    %1983 = vmatpush1.msra.mxu0 0.0
    %1984 = vmatprep.subr.mxu0 0.0
    %1985 = vmatpush1.msra.mxu0 0.0
    %1986 = vmatprep.subr.mxu0 0.0
    %1987 = vmatpush1.msra.mxu0 0.0
    %1988 = vmatprep.subr.mxu0 0.0
    %1989 = vmatpush1.msra.mxu0 0.0
    %1990 = vmatprep.subr.mxu0 0.0
    %1991 = vmatpush1.msra.mxu0 0.0
    %1992 = vmatprep.subr.mxu0 0.0
    %1993 = vmatpush1.msra.mxu0 0.0
    %1994 = vmatprep.subr.mxu0 0.0
    %1995 = vmatpush1.msra.mxu0 0.0
    %1996 = vmatprep.subr.mxu0 0.0
    %1997 = vmatpush1.msra.mxu0 0.0
    %1998 = vmatprep.subr.mxu0 0.0
    %1999 = vmatpush1.msra.mxu0 0.0
    %2000 = vmatprep.subr.mxu0 0.0
    %2001 = vmatpush1.msra.mxu0 0.0
    %2002 = vmatprep.subr.mxu0 0.0
    %2003 = vmatpush1.msra.mxu0 0.0
    %2004 = vmatprep.subr.mxu0 0.0
    %2005 = vmatpush1.msra.mxu0 0.0
    %2006 = vmatprep.subr.mxu0 0.0
    %2007 = vmatpush1.msra.mxu0 0.0
    %2008 = vmatprep.subr.mxu0 0.0
    %2009 = vmatpush1.msra.mxu0 0.0
    %2010 = vmatprep.subr.mxu0 0.0
    %2011 = vmatpush1.msra.mxu0 0.0
    %2012 = vmatprep.subr.mxu0 0.0
    %2013 = vmatpush1.msra.mxu0 0.0
    %2014 = vmatprep.subr.mxu0 0.0
    %2015 = vmatpush1.msra.mxu0 0.0
    %2016 = vmatprep.subr.mxu0 0.0
    %2017 = vmatpush1.msra.mxu0 0.0
    %2018 = vmatprep.subr.mxu0 0.0
    %2019 = vmatpush1.msra.mxu0 0.0
    %2020 = vmatprep.subr.mxu0 0.0
    %2021 = vmatpush1.msra.mxu0 0.0
    %2022 = vmatprep.subr.mxu0 0.0
    %2023 = vmatpush1.msra.mxu0 0.0
    %2024 = vmatprep.subr.mxu0 0.0
    %2025 = vmatpush1.msra.mxu0 0.0
    %2026 = vmatprep.mubr.f32.mxu0 0.0
    %2027 = vmatmul.mubr.f32.gmra.mrb[0].mxu0 %v1957
    %v2028 = vpop.f32.mrb[0].mxu0
    %v2029 = vadd.f32 0.0, %v2028
    %v2030 = vpop.f32.mrb[0].mxu0
    %2031 = vmatprep.mubr.f32.mxu0 0.0
    %2032 = vmatmul.mubr.f32.gmra.mrb[0].mxu0 %v1960
    %v2033 = vpop.f32.mrb[0].mxu0
    %v2034 = vadd.f32 0.0, %v2033
    %v2035 = vpop.f32.mrb[0].mxu0
    %2036 = vdwg.mxu0
    %v2037 = vadd.f32 %v1362, %v2029
    %v2038 = vadd.f32 %v1367, %v2034
    %s2039 = scalar_lea.vmem %s1, 96
    %v2040 = vld [vmem:[%s2039] sm:$0xff]
    %v2041 = vld [vmem:[%s2039 + $0x8] sm:$0xff]
    %v2042 = vld [vmem:[%s2039 + $0x10] sm:$0xff]
    %v2043 = vld [vmem:[%s2039 + $0x18] sm:$0xff]
    %s2044 = scalar_lea.vmem %s2, 3
    %v2045 = vld [vmem:[%s2044] sm:$0x1]
    %v2047 = vlaneseq
    %v2048 = vshrl.u32 %v2047, 7
    %v2049 = vsub.s32 0, %v2048
    %v2050 = vrot.slane %v2045, %v2049
    %2052 = vmatprep.subr.mxu0 0.0
    %2053 = vmatpush1.msra.mxu0 %v2040
    %2054 = vmatprep.subr.mxu0 0.0
    %2055 = vmatpush1.msra.mxu0 %v2041
    %2056 = vmatprep.subr.mxu0 0.0
    %2057 = vmatpush1.msra.mxu0 %v2042
    %2058 = vmatprep.subr.mxu0 0.0
    %2059 = vmatpush1.msra.mxu0 %v2043
    %2060 = vmatprep.subr.mxu0 0.0
    %2061 = vmatpush1.msra.mxu0 0.0
    %2062 = vmatprep.subr.mxu0 0.0
    %2063 = vmatpush1.msra.mxu0 0.0
    %2064 = vmatprep.subr.mxu0 0.0
    %2065 = vmatpush1.msra.mxu0 0.0
    %2066 = vmatprep.subr.mxu0 0.0
    %2067 = vmatpush1.msra.mxu0 0.0
    %2068 = vmatprep.subr.mxu0 0.0
    %2069 = vmatpush1.msra.mxu0 0.0
    %2070 = vmatprep.subr.mxu0 0.0
    %2071 = vmatpush1.msra.mxu0 0.0
    %2072 = vmatprep.subr.mxu0 0.0
    %2073 = vmatpush1.msra.mxu0 0.0
    %2074 = vmatprep.subr.mxu0 0.0
    %2075 = vmatpush1.msra.mxu0 0.0
    %2076 = vmatprep.subr.mxu0 0.0
    %2077 = vmatpush1.msra.mxu0 0.0
    %2078 = vmatprep.subr.mxu0 0.0
    %2079 = vmatpush1.msra.mxu0 0.0
    %2080 = vmatprep.subr.mxu0 0.0
    %2081 = vmatpush1.msra.mxu0 0.0
    %2082 = vmatprep.subr.mxu0 0.0
    %2083 = vmatpush1.msra.mxu0 0.0
    %2084 = vmatprep.subr.mxu0 0.0
    %2085 = vmatpush1.msra.mxu0 0.0
    %2086 = vmatprep.subr.mxu0 0.0
    %2087 = vmatpush1.msra.mxu0 0.0
    %2088 = vmatprep.subr.mxu0 0.0
    %2089 = vmatpush1.msra.mxu0 0.0
    %2090 = vmatprep.subr.mxu0 0.0
    %2091 = vmatpush1.msra.mxu0 0.0
    %2092 = vmatprep.subr.mxu0 0.0
    %2093 = vmatpush1.msra.mxu0 0.0
    %2094 = vmatprep.subr.mxu0 0.0
    %2095 = vmatpush1.msra.mxu0 0.0
    %2096 = vmatprep.subr.mxu0 0.0
    %2097 = vmatpush1.msra.mxu0 0.0
    %2098 = vmatprep.subr.mxu0 0.0
    %2099 = vmatpush1.msra.mxu0 0.0
    %2100 = vmatprep.subr.mxu0 0.0
    %2101 = vmatpush1.msra.mxu0 0.0
    %2102 = vmatprep.subr.mxu0 0.0
    %2103 = vmatpush1.msra.mxu0 0.0
    %2104 = vmatprep.subr.mxu0 0.0
    %2105 = vmatpush1.msra.mxu0 0.0
    %2106 = vmatprep.subr.mxu0 0.0
    %2107 = vmatpush1.msra.mxu0 0.0
    %2108 = vmatprep.subr.mxu0 0.0
    %2109 = vmatpush1.msra.mxu0 0.0
    %2110 = vmatprep.subr.mxu0 0.0
    %2111 = vmatpush1.msra.mxu0 0.0
    %2112 = vmatprep.subr.mxu0 0.0
    %2113 = vmatpush1.msra.mxu0 0.0
    %2114 = vmatprep.subr.mxu0 0.0
    %2115 = vmatpush1.msra.mxu0 0.0
    %2116 = vmatprep.mubr.f32.mxu0 0.0
    %2117 = vmatmul.mubr.f32.gmra.mrb[0].mxu0 %v48
    %v2118 = vpop.f32.mrb[0].mxu0
    %v2119 = vadd.f32 %v2050, %v2118
    %v2120 = vpop.f32.mrb[0].mxu0
    %2121 = vmatprep.mubr.f32.mxu0 0.0
    %2122 = vmatmul.mubr.f32.gmra.mrb[0].mxu0 %v51
    %v2123 = vpop.f32.mrb[0].mxu0
    %v2124 = vadd.f32 %v2050, %v2123
    %v2125 = vpop.f32.mrb[0].mxu0
    %2126 = vdwg.mxu0
    %s2127 = scalar_lea.vmem %s3, 96
    %v2128 = vld [vmem:[%s2127] sm:$0xff]
    %v2129 = vld [vmem:[%s2127 + $0x8] sm:$0xff]
    %v2130 = vld [vmem:[%s2127 + $0x10] sm:$0xff]
    %v2131 = vld [vmem:[%s2127 + $0x18] sm:$0xff]
    %s2132 = scalar_lea.vmem %s4, 3
    %v2133 = vld [vmem:[%s2132] sm:$0x1]
    %v2135 = vlaneseq
    %v2136 = vshrl.u32 %v2135, 7
    %v2137 = vsub.s32 0, %v2136
    %v2138 = vrot.slane %v2133, %v2137
    %2140 = vmatprep.subr.mxu0 0.0
    %2141 = vmatpush1.msra.mxu0 %v2128
    %2142 = vmatprep.subr.mxu0 0.0
    %2143 = vmatpush1.msra.mxu0 %v2129
    %2144 = vmatprep.subr.mxu0 0.0
    %2145 = vmatpush1.msra.mxu0 %v2130
    %2146 = vmatprep.subr.mxu0 0.0
    %2147 = vmatpush1.msra.mxu0 %v2131
    %2148 = vmatprep.subr.mxu0 0.0
    %2149 = vmatpush1.msra.mxu0 0.0
    %2150 = vmatprep.subr.mxu0 0.0
    %2151 = vmatpush1.msra.mxu0 0.0
    %2152 = vmatprep.subr.mxu0 0.0
    %2153 = vmatpush1.msra.mxu0 0.0
    %2154 = vmatprep.subr.mxu0 0.0
    %2155 = vmatpush1.msra.mxu0 0.0
    %2156 = vmatprep.subr.mxu0 0.0
    %2157 = vmatpush1.msra.mxu0 0.0
    %2158 = vmatprep.subr.mxu0 0.0
    %2159 = vmatpush1.msra.mxu0 0.0
    %2160 = vmatprep.subr.mxu0 0.0
    %2161 = vmatpush1.msra.mxu0 0.0
    %2162 = vmatprep.subr.mxu0 0.0
    %2163 = vmatpush1.msra.mxu0 0.0
    %2164 = vmatprep.subr.mxu0 0.0
    %2165 = vmatpush1.msra.mxu0 0.0
    %2166 = vmatprep.subr.mxu0 0.0
    %2167 = vmatpush1.msra.mxu0 0.0
    %2168 = vmatprep.subr.mxu0 0.0
    %2169 = vmatpush1.msra.mxu0 0.0
    %2170 = vmatprep.subr.mxu0 0.0
    %2171 = vmatpush1.msra.mxu0 0.0
    %2172 = vmatprep.subr.mxu0 0.0
    %2173 = vmatpush1.msra.mxu0 0.0
    %2174 = vmatprep.subr.mxu0 0.0
    %2175 = vmatpush1.msra.mxu0 0.0
    %2176 = vmatprep.subr.mxu0 0.0
    %2177 = vmatpush1.msra.mxu0 0.0
    %2178 = vmatprep.subr.mxu0 0.0
    %2179 = vmatpush1.msra.mxu0 0.0
    %2180 = vmatprep.subr.mxu0 0.0
    %2181 = vmatpush1.msra.mxu0 0.0
    %2182 = vmatprep.subr.mxu0 0.0
    %2183 = vmatpush1.msra.mxu0 0.0
    %2184 = vmatprep.subr.mxu0 0.0
    %2185 = vmatpush1.msra.mxu0 0.0
    %2186 = vmatprep.subr.mxu0 0.0
    %2187 = vmatpush1.msra.mxu0 0.0
    %2188 = vmatprep.subr.mxu0 0.0
    %2189 = vmatpush1.msra.mxu0 0.0
    %2190 = vmatprep.subr.mxu0 0.0
    %2191 = vmatpush1.msra.mxu0 0.0
    %2192 = vmatprep.subr.mxu0 0.0
    %2193 = vmatpush1.msra.mxu0 0.0
    %2194 = vmatprep.subr.mxu0 0.0
    %2195 = vmatpush1.msra.mxu0 0.0
    %2196 = vmatprep.subr.mxu0 0.0
    %2197 = vmatpush1.msra.mxu0 0.0
    %2198 = vmatprep.subr.mxu0 0.0
    %2199 = vmatpush1.msra.mxu0 0.0
    %2200 = vmatprep.subr.mxu0 0.0
    %2201 = vmatpush1.msra.mxu0 0.0
    %2202 = vmatprep.subr.mxu0 0.0
    %2203 = vmatpush1.msra.mxu0 0.0
    %2204 = vmatprep.mubr.f32.mxu0 0.0
    %2205 = vmatmul.mubr.f32.gmra.mrb[0].mxu0 %v48
    %v2206 = vpop.f32.mrb[0].mxu0
    %v2207 = vadd.f32 %v2138, %v2206
    %v2208 = vpop.f32.mrb[0].mxu0
    %2209 = vmatprep.mubr.f32.mxu0 0.0
    %2210 = vmatmul.mubr.f32.gmra.mrb[0].mxu0 %v51
    %v2211 = vpop.f32.mrb[0].mxu0
    %v2212 = vadd.f32 %v2138, %v2211
    %v2213 = vpop.f32.mrb[0].mxu0
    %2214 = vdwg.mxu0
    %s2215 = scalar_lea.vmem %s5, 96
    %v2216 = vld [vmem:[%s2215] sm:$0xff]
    %v2217 = vld [vmem:[%s2215 + $0x8] sm:$0xff]
    %v2218 = vld [vmem:[%s2215 + $0x10] sm:$0xff]
    %v2219 = vld [vmem:[%s2215 + $0x18] sm:$0xff]
    %s2220 = scalar_lea.vmem %s6, 3
    %v2221 = vld [vmem:[%s2220] sm:$0x1]
    %v2223 = vlaneseq
    %v2224 = vshrl.u32 %v2223, 7
    %v2225 = vsub.s32 0, %v2224
    %v2226 = vrot.slane %v2221, %v2225
    %2228 = vmatprep.subr.mxu0 0.0
    %2229 = vmatpush1.msra.mxu0 %v2216
    %2230 = vmatprep.subr.mxu0 0.0
    %2231 = vmatpush1.msra.mxu0 %v2217
    %2232 = vmatprep.subr.mxu0 0.0
    %2233 = vmatpush1.msra.mxu0 %v2218
    %2234 = vmatprep.subr.mxu0 0.0
    %2235 = vmatpush1.msra.mxu0 %v2219
    %2236 = vmatprep.subr.mxu0 0.0
    %2237 = vmatpush1.msra.mxu0 0.0
    %2238 = vmatprep.subr.mxu0 0.0
    %2239 = vmatpush1.msra.mxu0 0.0
    %2240 = vmatprep.subr.mxu0 0.0
    %2241 = vmatpush1.msra.mxu0 0.0
    %2242 = vmatprep.subr.mxu0 0.0
    %2243 = vmatpush1.msra.mxu0 0.0
    %2244 = vmatprep.subr.mxu0 0.0
    %2245 = vmatpush1.msra.mxu0 0.0
    %2246 = vmatprep.subr.mxu0 0.0
    %2247 = vmatpush1.msra.mxu0 0.0
    %2248 = vmatprep.subr.mxu0 0.0
    %2249 = vmatpush1.msra.mxu0 0.0
    %2250 = vmatprep.subr.mxu0 0.0
    %2251 = vmatpush1.msra.mxu0 0.0
    %2252 = vmatprep.subr.mxu0 0.0
    %2253 = vmatpush1.msra.mxu0 0.0
    %2254 = vmatprep.subr.mxu0 0.0
    %2255 = vmatpush1.msra.mxu0 0.0
    %2256 = vmatprep.subr.mxu0 0.0
    %2257 = vmatpush1.msra.mxu0 0.0
    %2258 = vmatprep.subr.mxu0 0.0
    %2259 = vmatpush1.msra.mxu0 0.0
    %2260 = vmatprep.subr.mxu0 0.0
    %2261 = vmatpush1.msra.mxu0 0.0
    %2262 = vmatprep.subr.mxu0 0.0
    %2263 = vmatpush1.msra.mxu0 0.0
    %2264 = vmatprep.subr.mxu0 0.0
    %2265 = vmatpush1.msra.mxu0 0.0
    %2266 = vmatprep.subr.mxu0 0.0
    %2267 = vmatpush1.msra.mxu0 0.0
    %2268 = vmatprep.subr.mxu0 0.0
    %2269 = vmatpush1.msra.mxu0 0.0
    %2270 = vmatprep.subr.mxu0 0.0
    %2271 = vmatpush1.msra.mxu0 0.0
    %2272 = vmatprep.subr.mxu0 0.0
    %2273 = vmatpush1.msra.mxu0 0.0
    %2274 = vmatprep.subr.mxu0 0.0
    %2275 = vmatpush1.msra.mxu0 0.0
    %2276 = vmatprep.subr.mxu0 0.0
    %2277 = vmatpush1.msra.mxu0 0.0
    %2278 = vmatprep.subr.mxu0 0.0
    %2279 = vmatpush1.msra.mxu0 0.0
    %2280 = vmatprep.subr.mxu0 0.0
    %2281 = vmatpush1.msra.mxu0 0.0
    %2282 = vmatprep.subr.mxu0 0.0
    %2283 = vmatpush1.msra.mxu0 0.0
    %2284 = vmatprep.subr.mxu0 0.0
    %2285 = vmatpush1.msra.mxu0 0.0
    %2286 = vmatprep.subr.mxu0 0.0
    %2287 = vmatpush1.msra.mxu0 0.0
    %2288 = vmatprep.subr.mxu0 0.0
    %2289 = vmatpush1.msra.mxu0 0.0
    %2290 = vmatprep.subr.mxu0 0.0
    %2291 = vmatpush1.msra.mxu0 0.0
    %2292 = vmatprep.mubr.f32.mxu0 0.0
    %2293 = vmatmul.mubr.f32.gmra.mrb[0].mxu0 %v48
    %v2294 = vpop.f32.mrb[0].mxu0
    %v2295 = vadd.f32 %v2226, %v2294
    %v2296 = vpop.f32.mrb[0].mxu0
    %2297 = vmatprep.mubr.f32.mxu0 0.0
    %2298 = vmatmul.mubr.f32.gmra.mrb[0].mxu0 %v51
    %v2299 = vpop.f32.mrb[0].mxu0
    %v2300 = vadd.f32 %v2226, %v2299
    %v2301 = vpop.f32.mrb[0].mxu0
    %2302 = vdwg.mxu0
    %v2304 = vsel %vm300, %v2119, 0
    %v2307 = vsel %vm300, %v2207, 0
    %2309 = vmatprep.subr.mxu0 0.0
    %2310 = vmatpush1.xpose.msra.mxu0 %v2307
    %2311 = vmatprep.subr.mxu0 0.0
    %2312 = vmatpush1.xpose.msra.mxu0 0.0
    %2313 = vmatprep.subr.mxu0 0.0
    %2314 = vmatpush1.xpose.msra.mxu0 0.0
    %2315 = vmatprep.subr.mxu0 0.0
    %2316 = vmatpush1.xpose.msra.mxu0 0.0
    %2317 = vmatprep.subr.mxu0 0.0
    %2318 = vmatpush1.xpose.msra.mxu0 0.0
    %2319 = vmatprep.subr.mxu0 0.0
    %2320 = vmatpush1.xpose.msra.mxu0 0.0
    %2321 = vmatprep.subr.mxu0 0.0
    %2322 = vmatpush1.xpose.msra.mxu0 0.0
    %2323 = vmatprep.subr.mxu0 0.0
    %2324 = vmatpush1.xpose.msra.mxu0 0.0
    %2325 = vmatprep.subr.mxu0 0.0
    %2326 = vmatpush1.xpose.msra.mxu0 0.0
    %2327 = vmatprep.subr.mxu0 0.0
    %2328 = vmatpush1.xpose.msra.mxu0 0.0
    %2329 = vmatprep.subr.mxu0 0.0
    %2330 = vmatpush1.xpose.msra.mxu0 0.0
    %2331 = vmatprep.subr.mxu0 0.0
    %2332 = vmatpush1.xpose.msra.mxu0 0.0
    %2333 = vmatprep.subr.mxu0 0.0
    %2334 = vmatpush1.xpose.msra.mxu0 0.0
    %2335 = vmatprep.subr.mxu0 0.0
    %2336 = vmatpush1.xpose.msra.mxu0 0.0
    %2337 = vmatprep.subr.mxu0 0.0
    %2338 = vmatpush1.xpose.msra.mxu0 0.0
    %2339 = vmatprep.subr.mxu0 0.0
    %2340 = vmatpush1.xpose.msra.mxu0 0.0
    %2341 = vmatprep.subr.mxu0 0.0
    %2342 = vmatpush1.xpose.msra.mxu0 0.0
    %2343 = vmatprep.subr.mxu0 0.0
    %2344 = vmatpush1.xpose.msra.mxu0 0.0
    %2345 = vmatprep.subr.mxu0 0.0
    %2346 = vmatpush1.xpose.msra.mxu0 0.0
    %2347 = vmatprep.subr.mxu0 0.0
    %2348 = vmatpush1.xpose.msra.mxu0 0.0
    %2349 = vmatprep.subr.mxu0 0.0
    %2350 = vmatpush1.xpose.msra.mxu0 0.0
    %2351 = vmatprep.subr.mxu0 0.0
    %2352 = vmatpush1.xpose.msra.mxu0 0.0
    %2353 = vmatprep.subr.mxu0 0.0
    %2354 = vmatpush1.xpose.msra.mxu0 0.0
    %2355 = vmatprep.subr.mxu0 0.0
    %2356 = vmatpush1.xpose.msra.mxu0 0.0
    %2357 = vmatprep.subr.mxu0 0.0
    %2358 = vmatpush1.xpose.msra.mxu0 0.0
    %2359 = vmatprep.subr.mxu0 0.0
    %2360 = vmatpush1.xpose.msra.mxu0 0.0
    %2361 = vmatprep.subr.mxu0 0.0
    %2362 = vmatpush1.xpose.msra.mxu0 0.0
    %2363 = vmatprep.subr.mxu0 0.0
    %2364 = vmatpush1.xpose.msra.mxu0 0.0
    %2365 = vmatprep.subr.mxu0 0.0
    %2366 = vmatpush1.xpose.msra.mxu0 0.0
    %2367 = vmatprep.subr.mxu0 0.0
    %2368 = vmatpush1.xpose.msra.mxu0 0.0
    %2369 = vmatprep.subr.mxu0 0.0
    %2370 = vmatpush1.xpose.msra.mxu0 0.0
    %2371 = vmatprep.subr.mxu0 0.0
    %2372 = vmatpush1.xpose.msra.mxu0 0.0
    %2373 = vmatprep.mubr.f32.mxu0 0.0
    %2374 = vmatmul.mubr.f32.gmra.mrb[0].mxu0 %v2304
    %v2375 = vpop.f32.mrb[0].mxu0
    %v2376 = vadd.f32 0.0, %v2375
    %v2377 = vpop.f32.mrb[0].mxu0
    %2378 = vdwg.mxu0
    %v2380 = vsel %vm300, %v2124, 0
    %v2383 = vsel %vm300, %v2212, 0
    %2385 = vmatprep.subr.mxu0 0.0
    %2386 = vmatpush1.xpose.msra.mxu0 %v2383
    %2387 = vmatprep.subr.mxu0 0.0
    %2388 = vmatpush1.xpose.msra.mxu0 0.0
    %2389 = vmatprep.subr.mxu0 0.0
    %2390 = vmatpush1.xpose.msra.mxu0 0.0
    %2391 = vmatprep.subr.mxu0 0.0
    %2392 = vmatpush1.xpose.msra.mxu0 0.0
    %2393 = vmatprep.subr.mxu0 0.0
    %2394 = vmatpush1.xpose.msra.mxu0 0.0
    %2395 = vmatprep.subr.mxu0 0.0
    %2396 = vmatpush1.xpose.msra.mxu0 0.0
    %2397 = vmatprep.subr.mxu0 0.0
    %2398 = vmatpush1.xpose.msra.mxu0 0.0
    %2399 = vmatprep.subr.mxu0 0.0
    %2400 = vmatpush1.xpose.msra.mxu0 0.0
    %2401 = vmatprep.subr.mxu0 0.0
    %2402 = vmatpush1.xpose.msra.mxu0 0.0
    %2403 = vmatprep.subr.mxu0 0.0
    %2404 = vmatpush1.xpose.msra.mxu0 0.0
    %2405 = vmatprep.subr.mxu0 0.0
    %2406 = vmatpush1.xpose.msra.mxu0 0.0
    %2407 = vmatprep.subr.mxu0 0.0
    %2408 = vmatpush1.xpose.msra.mxu0 0.0
    %2409 = vmatprep.subr.mxu0 0.0
    %2410 = vmatpush1.xpose.msra.mxu0 0.0
    %2411 = vmatprep.subr.mxu0 0.0
    %2412 = vmatpush1.xpose.msra.mxu0 0.0
    %2413 = vmatprep.subr.mxu0 0.0
    %2414 = vmatpush1.xpose.msra.mxu0 0.0
    %2415 = vmatprep.subr.mxu0 0.0
    %2416 = vmatpush1.xpose.msra.mxu0 0.0
    %2417 = vmatprep.subr.mxu0 0.0
    %2418 = vmatpush1.xpose.msra.mxu0 0.0
    %2419 = vmatprep.subr.mxu0 0.0
    %2420 = vmatpush1.xpose.msra.mxu0 0.0
    %2421 = vmatprep.subr.mxu0 0.0
    %2422 = vmatpush1.xpose.msra.mxu0 0.0
    %2423 = vmatprep.subr.mxu0 0.0
    %2424 = vmatpush1.xpose.msra.mxu0 0.0
    %2425 = vmatprep.subr.mxu0 0.0
    %2426 = vmatpush1.xpose.msra.mxu0 0.0
    %2427 = vmatprep.subr.mxu0 0.0
    %2428 = vmatpush1.xpose.msra.mxu0 0.0
    %2429 = vmatprep.subr.mxu0 0.0
    %2430 = vmatpush1.xpose.msra.mxu0 0.0
    %2431 = vmatprep.subr.mxu0 0.0
    %2432 = vmatpush1.xpose.msra.mxu0 0.0
    %2433 = vmatprep.subr.mxu0 0.0
    %2434 = vmatpush1.xpose.msra.mxu0 0.0
    %2435 = vmatprep.subr.mxu0 0.0
    %2436 = vmatpush1.xpose.msra.mxu0 0.0
    %2437 = vmatprep.subr.mxu0 0.0
    %2438 = vmatpush1.xpose.msra.mxu0 0.0
    %2439 = vmatprep.subr.mxu0 0.0
    %2440 = vmatpush1.xpose.msra.mxu0 0.0
    %2441 = vmatprep.subr.mxu0 0.0
    %2442 = vmatpush1.xpose.msra.mxu0 0.0
    %2443 = vmatprep.subr.mxu0 0.0
    %2444 = vmatpush1.xpose.msra.mxu0 0.0
    %2445 = vmatprep.subr.mxu0 0.0
    %2446 = vmatpush1.xpose.msra.mxu0 0.0
    %2447 = vmatprep.subr.mxu0 0.0
    %2448 = vmatpush1.xpose.msra.mxu0 0.0
    %2449 = vmatprep.mubr.f32.mxu0 0.0
    %2450 = vmatmul.mubr.f32.gmra.mrb[0].mxu0 %v2380
    %v2451 = vpop.f32.mrb[0].mxu0
    %v2452 = vadd.f32 0.0, %v2451
    %v2453 = vpop.f32.mrb[0].mxu0
    %2454 = vdwg.mxu0
    %v2455 = vsel %vm300, %v2376, -inf
    %2456 = vmax.xlane.f32.xlu0 %v2455
    %v2457 = vpop.xlane.xlu0 %2456
    %v2458 = vsel %vm300, %v2452, -inf
    %2459 = vmax.xlane.f32.xlu0 %v2458
    %v2460 = vpop.xlane.xlu0 %2459
    %v2461 = vsub.f32 %v2376, %v2457
    %v2462 = vsub.f32 %v2452, %v2460
    %v2463 = vmul.f32 %v2461, 1.442695
    %v2464 = vpow.pop %v2463
    %v2465 = vmul.f32 %v2462, 1.442695
    %v2466 = vpow.pop %v2465
    %v2467 = vsel %vm300, %v2464, 0.0
    %2468 = vadd.xlane.f32.xlu0 %v2467
    %v2469 = vpop.xlane.xlu0 %2468
    %v2470 = vsel %vm300, %v2466, 0.0
    %2471 = vadd.xlane.f32.xlu0 %v2470
    %v2472 = vpop.xlane.xlu0 %2471
    %v2473 = vrcp.pop %v2469
    %v2474 = vrcp.pop %v2472
    %v2475 = vmul.f32 %v2464, %v2473
    %v2476 = vmul.f32 %v2466, %v2474
    %v2478 = vsel %vm300, %v2475, 0
    %2480 = vmatprep.subr.mxu0 0.0
    %2481 = vmatpush1.msra.mxu0 %v2295
    %2482 = vmatprep.subr.mxu0 0.0
    %2483 = vmatpush1.msra.mxu0 0.0
    %2484 = vmatprep.subr.mxu0 0.0
    %2485 = vmatpush1.msra.mxu0 0.0
    %2486 = vmatprep.subr.mxu0 0.0
    %2487 = vmatpush1.msra.mxu0 0.0
    %2488 = vmatprep.subr.mxu0 0.0
    %2489 = vmatpush1.msra.mxu0 0.0
    %2490 = vmatprep.subr.mxu0 0.0
    %2491 = vmatpush1.msra.mxu0 0.0
    %2492 = vmatprep.subr.mxu0 0.0
    %2493 = vmatpush1.msra.mxu0 0.0
    %2494 = vmatprep.subr.mxu0 0.0
    %2495 = vmatpush1.msra.mxu0 0.0
    %2496 = vmatprep.subr.mxu0 0.0
    %2497 = vmatpush1.msra.mxu0 0.0
    %2498 = vmatprep.subr.mxu0 0.0
    %2499 = vmatpush1.msra.mxu0 0.0
    %2500 = vmatprep.subr.mxu0 0.0
    %2501 = vmatpush1.msra.mxu0 0.0
    %2502 = vmatprep.subr.mxu0 0.0
    %2503 = vmatpush1.msra.mxu0 0.0
    %2504 = vmatprep.subr.mxu0 0.0
    %2505 = vmatpush1.msra.mxu0 0.0
    %2506 = vmatprep.subr.mxu0 0.0
    %2507 = vmatpush1.msra.mxu0 0.0
    %2508 = vmatprep.subr.mxu0 0.0
    %2509 = vmatpush1.msra.mxu0 0.0
    %2510 = vmatprep.subr.mxu0 0.0
    %2511 = vmatpush1.msra.mxu0 0.0
    %2512 = vmatprep.subr.mxu0 0.0
    %2513 = vmatpush1.msra.mxu0 0.0
    %2514 = vmatprep.subr.mxu0 0.0
    %2515 = vmatpush1.msra.mxu0 0.0
    %2516 = vmatprep.subr.mxu0 0.0
    %2517 = vmatpush1.msra.mxu0 0.0
    %2518 = vmatprep.subr.mxu0 0.0
    %2519 = vmatpush1.msra.mxu0 0.0
    %2520 = vmatprep.subr.mxu0 0.0
    %2521 = vmatpush1.msra.mxu0 0.0
    %2522 = vmatprep.subr.mxu0 0.0
    %2523 = vmatpush1.msra.mxu0 0.0
    %2524 = vmatprep.subr.mxu0 0.0
    %2525 = vmatpush1.msra.mxu0 0.0
    %2526 = vmatprep.subr.mxu0 0.0
    %2527 = vmatpush1.msra.mxu0 0.0
    %2528 = vmatprep.subr.mxu0 0.0
    %2529 = vmatpush1.msra.mxu0 0.0
    %2530 = vmatprep.subr.mxu0 0.0
    %2531 = vmatpush1.msra.mxu0 0.0
    %2532 = vmatprep.subr.mxu0 0.0
    %2533 = vmatpush1.msra.mxu0 0.0
    %2534 = vmatprep.subr.mxu0 0.0
    %2535 = vmatpush1.msra.mxu0 0.0
    %2536 = vmatprep.subr.mxu0 0.0
    %2537 = vmatpush1.msra.mxu0 0.0
    %2538 = vmatprep.subr.mxu0 0.0
    %2539 = vmatpush1.msra.mxu0 0.0
    %2540 = vmatprep.subr.mxu0 0.0
    %2541 = vmatpush1.msra.mxu0 0.0
    %2542 = vmatprep.subr.mxu0 0.0
    %2543 = vmatpush1.msra.mxu0 0.0
    %2544 = vmatprep.mubr.f32.mxu0 0.0
    %2545 = vmatmul.mubr.f32.gmra.mrb[0].mxu0 %v2478
    %v2546 = vpop.f32.mrb[0].mxu0
    %v2547 = vadd.f32 0.0, %v2546
    %v2548 = vpop.f32.mrb[0].mxu0
    %2549 = vdwg.mxu0
    %v2551 = vsel %vm300, %v2476, 0
    %2553 = vmatprep.subr.mxu0 0.0
    %2554 = vmatpush1.msra.mxu0 %v2300
    %2555 = vmatprep.subr.mxu0 0.0
    %2556 = vmatpush1.msra.mxu0 0.0
    %2557 = vmatprep.subr.mxu0 0.0
    %2558 = vmatpush1.msra.mxu0 0.0
    %2559 = vmatprep.subr.mxu0 0.0
    %2560 = vmatpush1.msra.mxu0 0.0
    %2561 = vmatprep.subr.mxu0 0.0
    %2562 = vmatpush1.msra.mxu0 0.0
    %2563 = vmatprep.subr.mxu0 0.0
    %2564 = vmatpush1.msra.mxu0 0.0
    %2565 = vmatprep.subr.mxu0 0.0
    %2566 = vmatpush1.msra.mxu0 0.0
    %2567 = vmatprep.subr.mxu0 0.0
    %2568 = vmatpush1.msra.mxu0 0.0
    %2569 = vmatprep.subr.mxu0 0.0
    %2570 = vmatpush1.msra.mxu0 0.0
    %2571 = vmatprep.subr.mxu0 0.0
    %2572 = vmatpush1.msra.mxu0 0.0
    %2573 = vmatprep.subr.mxu0 0.0
    %2574 = vmatpush1.msra.mxu0 0.0
    %2575 = vmatprep.subr.mxu0 0.0
    %2576 = vmatpush1.msra.mxu0 0.0
    %2577 = vmatprep.subr.mxu0 0.0
    %2578 = vmatpush1.msra.mxu0 0.0
    %2579 = vmatprep.subr.mxu0 0.0
    %2580 = vmatpush1.msra.mxu0 0.0
    %2581 = vmatprep.subr.mxu0 0.0
    %2582 = vmatpush1.msra.mxu0 0.0
    %2583 = vmatprep.subr.mxu0 0.0
    %2584 = vmatpush1.msra.mxu0 0.0
    %2585 = vmatprep.subr.mxu0 0.0
    %2586 = vmatpush1.msra.mxu0 0.0
    %2587 = vmatprep.subr.mxu0 0.0
    %2588 = vmatpush1.msra.mxu0 0.0
    %2589 = vmatprep.subr.mxu0 0.0
    %2590 = vmatpush1.msra.mxu0 0.0
    %2591 = vmatprep.subr.mxu0 0.0
    %2592 = vmatpush1.msra.mxu0 0.0
    %2593 = vmatprep.subr.mxu0 0.0
    %2594 = vmatpush1.msra.mxu0 0.0
    %2595 = vmatprep.subr.mxu0 0.0
    %2596 = vmatpush1.msra.mxu0 0.0
    %2597 = vmatprep.subr.mxu0 0.0
    %2598 = vmatpush1.msra.mxu0 0.0
    %2599 = vmatprep.subr.mxu0 0.0
    %2600 = vmatpush1.msra.mxu0 0.0
    %2601 = vmatprep.subr.mxu0 0.0
    %2602 = vmatpush1.msra.mxu0 0.0
    %2603 = vmatprep.subr.mxu0 0.0
    %2604 = vmatpush1.msra.mxu0 0.0
    %2605 = vmatprep.subr.mxu0 0.0
    %2606 = vmatpush1.msra.mxu0 0.0
    %2607 = vmatprep.subr.mxu0 0.0
    %2608 = vmatpush1.msra.mxu0 0.0
    %2609 = vmatprep.subr.mxu0 0.0
    %2610 = vmatpush1.msra.mxu0 0.0
    %2611 = vmatprep.subr.mxu0 0.0
    %2612 = vmatpush1.msra.mxu0 0.0
    %2613 = vmatprep.subr.mxu0 0.0
    %2614 = vmatpush1.msra.mxu0 0.0
    %2615 = vmatprep.subr.mxu0 0.0
    %2616 = vmatpush1.msra.mxu0 0.0
    %2617 = vmatprep.mubr.f32.mxu0 0.0
    %2618 = vmatmul.mubr.f32.gmra.mrb[0].mxu0 %v2551
    %v2619 = vpop.f32.mrb[0].mxu0
    %v2620 = vadd.f32 0.0, %v2619
    %v2621 = vpop.f32.mrb[0].mxu0
    %2622 = vdwg.mxu0
    %s2623 = scalar_lea.vmem %s7, 24
    %v2624 = vld [vmem:[%s2623] sm:$0xff]
    %v2626 = vsel %vm300, %v2547, 0
    %v2629 = vsel %vm300, %v2620, 0
    %2631 = vmatprep.subr.mxu0 0.0
    %2632 = vmatpush1.msra.mxu0 %v2624
    %2633 = vmatprep.subr.mxu0 0.0
    %2634 = vmatpush1.msra.mxu0 0.0
    %2635 = vmatprep.subr.mxu0 0.0
    %2636 = vmatpush1.msra.mxu0 0.0
    %2637 = vmatprep.subr.mxu0 0.0
    %2638 = vmatpush1.msra.mxu0 0.0
    %2639 = vmatprep.subr.mxu0 0.0
    %2640 = vmatpush1.msra.mxu0 0.0
    %2641 = vmatprep.subr.mxu0 0.0
    %2642 = vmatpush1.msra.mxu0 0.0
    %2643 = vmatprep.subr.mxu0 0.0
    %2644 = vmatpush1.msra.mxu0 0.0
    %2645 = vmatprep.subr.mxu0 0.0
    %2646 = vmatpush1.msra.mxu0 0.0
    %2647 = vmatprep.subr.mxu0 0.0
    %2648 = vmatpush1.msra.mxu0 0.0
    %2649 = vmatprep.subr.mxu0 0.0
    %2650 = vmatpush1.msra.mxu0 0.0
    %2651 = vmatprep.subr.mxu0 0.0
    %2652 = vmatpush1.msra.mxu0 0.0
    %2653 = vmatprep.subr.mxu0 0.0
    %2654 = vmatpush1.msra.mxu0 0.0
    %2655 = vmatprep.subr.mxu0 0.0
    %2656 = vmatpush1.msra.mxu0 0.0
    %2657 = vmatprep.subr.mxu0 0.0
    %2658 = vmatpush1.msra.mxu0 0.0
    %2659 = vmatprep.subr.mxu0 0.0
    %2660 = vmatpush1.msra.mxu0 0.0
    %2661 = vmatprep.subr.mxu0 0.0
    %2662 = vmatpush1.msra.mxu0 0.0
    %2663 = vmatprep.subr.mxu0 0.0
    %2664 = vmatpush1.msra.mxu0 0.0
    %2665 = vmatprep.subr.mxu0 0.0
    %2666 = vmatpush1.msra.mxu0 0.0
    %2667 = vmatprep.subr.mxu0 0.0
    %2668 = vmatpush1.msra.mxu0 0.0
    %2669 = vmatprep.subr.mxu0 0.0
    %2670 = vmatpush1.msra.mxu0 0.0
    %2671 = vmatprep.subr.mxu0 0.0
    %2672 = vmatpush1.msra.mxu0 0.0
    %2673 = vmatprep.subr.mxu0 0.0
    %2674 = vmatpush1.msra.mxu0 0.0
    %2675 = vmatprep.subr.mxu0 0.0
    %2676 = vmatpush1.msra.mxu0 0.0
    %2677 = vmatprep.subr.mxu0 0.0
    %2678 = vmatpush1.msra.mxu0 0.0
    %2679 = vmatprep.subr.mxu0 0.0
    %2680 = vmatpush1.msra.mxu0 0.0
    %2681 = vmatprep.subr.mxu0 0.0
    %2682 = vmatpush1.msra.mxu0 0.0
    %2683 = vmatprep.subr.mxu0 0.0
    %2684 = vmatpush1.msra.mxu0 0.0
    %2685 = vmatprep.subr.mxu0 0.0
    %2686 = vmatpush1.msra.mxu0 0.0
    %2687 = vmatprep.subr.mxu0 0.0
    %2688 = vmatpush1.msra.mxu0 0.0
    %2689 = vmatprep.subr.mxu0 0.0
    %2690 = vmatpush1.msra.mxu0 0.0
    %2691 = vmatprep.subr.mxu0 0.0
    %2692 = vmatpush1.msra.mxu0 0.0
    %2693 = vmatprep.subr.mxu0 0.0
    %2694 = vmatpush1.msra.mxu0 0.0
    %2695 = vmatprep.mubr.f32.mxu0 0.0
    %2696 = vmatmul.mubr.f32.gmra.mrb[0].mxu0 %v2626
    %v2697 = vpop.f32.mrb[0].mxu0
    %v2698 = vadd.f32 0.0, %v2697
    %v2699 = vpop.f32.mrb[0].mxu0
    %2700 = vmatprep.mubr.f32.mxu0 0.0
    %2701 = vmatmul.mubr.f32.gmra.mrb[0].mxu0 %v2629
    %v2702 = vpop.f32.mrb[0].mxu0
    %v2703 = vadd.f32 0.0, %v2702
    %v2704 = vpop.f32.mrb[0].mxu0
    %2705 = vdwg.mxu0
    %v2706 = vadd.f32 %v2037, %v2698
    %v2707 = vadd.f32 %v2038, %v2703
    %v2708 = vld [vmem:[%s8] sm:$0x1]
    %v2710 = vlaneseq
    %v2711 = vshrl.u32 %v2710, 7
    %v2712 = vsub.s32 0, %v2711
    %v2713 = vrot.slane %v2708, %v2712
    %v2715 = vadd.f32 %v2706, %v2713
    %v2716 = vadd.f32 %v2707, %v2713
    %2717 = vst.msk [vmem:[#allocation2] sm:$0xff] %vm46, %v2715
    %2718 = vst.msk [vmem:[#allocation2 + $0x8] sm:$0xff] %vm46, %v2716
    // Predicated region
    $region38: #{tpu_custom_call.1} parent=1 // pred_check
      _
    $region39: #{tpu_custom_call.1} parent=1 // pred_check_branch
      %2720 = sbr.rel (0) target = $region41
    $region40: #{tpu_custom_call.1} parent=1 // pred_region
      %s2722 = ssub.s32 256, 256
      %2723 = vsyncadd [#allocation3], %s2722
      %s2724 = sshll.u32 [#allocation2], 4
      %s2725 = int_to_ptr.vmem [resolvable:$true] %s2724
      %2730 = dma.vmem_to_hbm [thread:$0]  %s2725, 256, %s9, [#allocation3], 128, 128, 8
    $region41: #{tpu_custom_call.1} parent=1 // pred_fallthru
      _
    // Predicated region
    $region42: #{tpu_custom_call.1} parent=1 // pred_check
      _
    $region43: #{tpu_custom_call.1} parent=1 // pred_check_branch
      %2732 = sbr.rel (0) target = $region45
    $region44: #{tpu_custom_call.1} parent=1 // pred_region
      %2733 = dma.done [#allocation3], 256
    $region45: #{tpu_custom_call.1} parent=1 // pred_fallthru
      _
    %2734 = vsyncpa [#allocation3], 1

</llo_original>
